<compile_context>
chip_gen: v6e
topology: v6e:2x2x1
jax: 0.10.0
libtpu: 0.0.40
codegen_flags: <defaults>
</compile_context>

<pallas_src>
import numpy as np

import jax
import jax.numpy as jnp
from jax.experimental import pallas as pl
from jax.experimental.pallas import tpu as pltpu

B, C_IN, H, W = 2, 3, 16, 16
C1 = 8
NUM_CLASSES = 10
KSIZE = 3

BH = B * H                      # packed row count (32)
CP = W * C1                     # packed lane count per activation (128); stem input padded to CP
assert CP == 128

CIFAR_MEAN = np.array([0.4914, 0.4822, 0.4465], np.float32)
CIFAR_SIGMA = np.array([0.2023, 0.1994, 0.2010], np.float32)

# --- bf16 weight-slab row offsets (all multiples of the bf16 (16,128) tile) ---
R_W0 = 0                        # (3*CP, CP) banded stem conv weight
R_W1 = R_W0 + 3 * CP            # (3*CP, CP) block conv1
R_W2 = R_W1 + 3 * CP            # (3*CP, CP) block conv2
R_SM = R_W2 + 3 * CP            # (BH, BH) row-shift (-1), lane-padded to CP
R_SP = R_SM + BH                # (BH, BH) row-shift (+1)
R_ASEL = R_SP + BH              # (16, BH) per-image row selector (rows 0..B-1 used)
R_WF = R_ASEL + 16              # (CP, CP) pooled-FC weight, 1/(H*W) folded, cols padded to CP
W_ROWS = R_WF + CP              # 1360 rows total


# ----------------------------- fused Pallas kernel -----------------------------
def fused_forward_kernel(x_ref, w_ref, v_ref, o_ref):
    f32, bf16 = jnp.float32, jnp.bfloat16

    # Carve the packed slabs (static, tile-aligned slices: no data movement).
    sm = w_ref[R_SM:R_SM + BH, 0:BH]           # picks row i-1 (0 at image top / batch boundary)
    sp = w_ref[R_SP:R_SP + BH, 0:BH]           # picks row i+1 (0 at image bottom / batch boundary)
    asel = w_ref[R_ASEL:R_ASEL + B, 0:BH]      # 0/1 per-image row selector for the pooling sum
    wf = w_ref[R_WF:R_WF + CP, :]              # pooled-FC weight (1/(H*W) folded in)

    nscale = v_ref[0:1, :]
    nbias = v_ref[1:2, :]

    def conv_bn(xin, r_w, r_s):
        # 3x3 conv (+ BN scale/bias) on a packed (B*H, CP) activation -> (B*H, CP).
        s_pk = v_ref[r_s:r_s + 1, :]
        b_pk = v_ref[r_s + 1:r_s + 2, :]
        wbig = w_ref[r_w:r_w + 3 * CP, :]                                     # (384, 128) bf16
        xb = xin.astype(bf16)
        # Row shifts: exact 0/1 selections of the bf16 values (cast back is lossless).
        xm = jnp.dot(sm, xb, preferred_element_type=f32).astype(bf16)        # x(b, i-1, :)
        xp = jnp.dot(sp, xb, preferred_element_type=f32).astype(bf16)        # x(b, i+1, :)
        # One K-concatenated MXU matmul folds the three vertical taps (K = 3*128 = 384).
        x3 = jnp.concatenate([xm, xb, xp], axis=1)                           # (32, 384)
        y = jnp.dot(x3, wbig, preferred_element_type=f32)                    # (32, 128) f32
        return y * s_pk + b_pk

    # CIFAR normalization: one fused multiply-add (pad lanes have scale/bias 0 and stay 0).
    x = x_ref[...] * nscale + nbias

    # stem: conv-bn-relu
    h0 = jnp.maximum(conv_bn(x, R_W0, 2), 0.0)
    # BasicBlock: conv-bn-relu, conv-bn, + identity skip (VMEM resident), relu
    h1 = jnp.maximum(conv_bn(h0, R_W1, 4), 0.0)
    h2 = jnp.maximum(conv_bn(h1, R_W2, 6) + h0, 0.0)

    # Global-average-pool + FC, reordered: per-image row sums first (M = B), then the pooled-FC
    # contraction into a lane-dense 128-wide output block (wrapper slices the 10 real logits).
    pooled = jnp.dot(asel, h2.astype(bf16), preferred_element_type=f32)       # (B, 128)
    logits = jnp.dot(pooled.astype(bf16), wf, preferred_element_type=f32)     # (B, 128)
    o_ref[...] = logits + v_ref[8:9, :]


# ----------------------------- host-side packing (pure numpy, done once) -----------------------------
def _banded_big(w_grid, cin):
    """w_grid: (3, 3, cin, C1).  Returns (3*CP, CP) f32: the three banded matrices Wc_{-1,0,+1}
    stacked along K.  Each folds the three horizontal taps and the zero padding along W; rows
    beyond W*cin (stem lane padding) are zero."""
    cout = w_grid.shape[-1]
    big = np.zeros((3 * CP, CP), np.float32)
    for t, dh in enumerate((-1, 0, 1)):
        for j in range(W):
            for dw in (-1, 0, 1):
                jp = j + dw
                if 0 <= jp < W:
                    big[t * CP + jp * cin:t * CP + (jp + 1) * cin,
                        j * cout:(j + 1) * cout] = w_grid[dh + 1, dw + 1]
    return big


def _row_shift(dh):
    """(B*H, B*H) 0/1 matrix: (S @ X)[b*H+i] = X[b*H+i+dh] when 0<=i+dh<H else 0."""
    s = np.zeros((BH, BH), np.float32)
    for b in range(B):
        for i in range(H):
            ip = i + dh
            if 0 <= ip < H:
                s[b * H + i, b * H + ip] = 1.0
    return s


def make_params():
    key = jax.random.PRNGKey(0)
    ks = jax.random.split(key, 8)

    def conv_w(k, cin, cout):
        return (jax.random.normal(k, (KSIZE, KSIZE, cin, cout), jnp.float32)
                / np.sqrt(KSIZE * KSIZE * cin))

    return {
        "w0": conv_w(ks[0], C_IN, C1),
        "s0": 1.0 + 0.1 * jax.random.normal(ks[1], (C1,), jnp.float32),
        "b0": 0.1 * jax.random.normal(ks[2], (C1,), jnp.float32),
        "w1": conv_w(ks[3], C1, C1),
        "s1": jnp.ones((C1,), jnp.float32),
        "b1": 0.05 * jnp.ones((C1,), jnp.float32),
        "w2": conv_w(ks[4], C1, C1),
        "s2": jnp.ones((C1,), jnp.float32),
        "b2": jnp.zeros((C1,), jnp.float32),
        "wf": jax.random.normal(ks[5], (C1, NUM_CLASSES), jnp.float32) / np.sqrt(C1),
        "bf": 0.01 * jax.random.normal(ks[6], (NUM_CLASSES,), jnp.float32),
    }


def pack_params(params):
    # ---- bf16 weight slab (one DMA) ----
    pieces = [
        _banded_big(np.asarray(params["w0"], np.float32), C_IN),
        _banded_big(np.asarray(params["w1"], np.float32), C1),
        _banded_big(np.asarray(params["w2"], np.float32), C1),
    ]
    sm = np.zeros((BH, CP), np.float32); sm[:, :BH] = _row_shift(-1)
    sp = np.zeros((BH, CP), np.float32); sp[:, :BH] = _row_shift(+1)
    asel = np.zeros((16, CP), np.float32)
    for b in range(B):
        asel[b, b * H:(b + 1) * H] = 1.0
    wf = np.zeros((CP, CP), np.float32)
    wf[:, :NUM_CLASSES] = np.tile(np.asarray(params["wf"], np.float32), (W, 1)) / float(H * W)
    pieces += [sm, sp, asel, wf]
    wslab = np.concatenate(pieces, axis=0)
    assert wslab.shape == (W_ROWS, CP)
    wslab = jnp.asarray(wslab, jnp.bfloat16)

    # ---- f32 vector slab (one DMA) ----
    v = np.zeros((16, CP), np.float32)
    v[0, :W * C_IN] = np.tile((1.0 / CIFAR_SIGMA).astype(np.float32), W)
    v[1, :W * C_IN] = np.tile((-CIFAR_MEAN / CIFAR_SIGMA).astype(np.float32), W)
    for k, (sname, bname) in enumerate((("s0", "b0"), ("s1", "b1"), ("s2", "b2"))):
        v[2 + 2 * k] = np.tile(np.asarray(params[sname], np.float32), W)
        v[3 + 2 * k] = np.tile(np.asarray(params[bname], np.float32), W)
    v[8, :NUM_CLASSES] = np.asarray(params["bf"], np.float32)
    vslab = jnp.asarray(v)
    return wslab, vslab


# ----------------------------- wrapper -----------------------------
@jax.jit
def normalized_resnet_forward(x_nchw, wslab, vslab):
    bsz = x_nchw.shape[0]
    # NCHW -> lane-dense packed (B*H, CP) slab, zero-padded beyond the W*C_IN real lanes.
    x_nhwc = jnp.transpose(x_nchw, (0, 2, 3, 1)).reshape(bsz * H, W * C_IN)
    x_packed = jnp.zeros((bsz * H, CP), jnp.float32).at[:, :W * C_IN].set(x_nhwc)

    bh = bsz * H
    flops = 3 * (2 * 2 * bh * bh * CP            # two row-shift selections per conv
                 + 2 * bh * (3 * CP) * CP)       # one K-concatenated tap matmul per conv
    flops += 2 * bsz * bh * CP + 2 * bsz * CP * CP   # pool row-sum + pooled-FC
    bytes_accessed = (x_packed.size * 4 + wslab.size * 2 + vslab.size * 4 + bsz * CP * 4)

    out = pl.pallas_call(
        fused_forward_kernel,
        out_shape=jax.ShapeDtypeStruct((bsz, CP), jnp.float32),
        in_specs=[pl.BlockSpec(memory_space=pltpu.MemorySpace.VMEM)] * 3,
        out_specs=pl.BlockSpec(memory_space=pltpu.MemorySpace.VMEM),
        cost_estimate=pl.CostEstimate(flops=flops, transcendentals=0,
                                      bytes_accessed=bytes_accessed),
    )(x_packed, wslab, vslab)
    return out[:, :NUM_CLASSES]


# ----------------------------- plain-JAX reference (bf16-pinned matmuls) -----------------------------
def im2col(x_nhwc, k=KSIZE, pad=1):
    bsz, h, w, c = x_nhwc.shape
    xp = jnp.pad(x_nhwc, ((0, 0), (pad, pad), (pad, pad), (0, 0)))
    cols = [xp[:, dh:dh + h, dw:dw + w, :] for dh in range(k) for dw in range(k)]
    return jnp.concatenate(cols, axis=-1).reshape(bsz * h * w, k * k * c)


def reference_forward(x_nchw, params):
    f32, bf16 = jnp.float32, jnp.bfloat16
    mean = jnp.asarray(CIFAR_MEAN).reshape(1, C_IN, 1, 1)
    sigma = jnp.asarray(CIFAR_SIGMA).reshape(1, C_IN, 1, 1)
    xn = (x_nchw - mean) / sigma
    x_nhwc = jnp.transpose(xn, (0, 2, 3, 1))
    bsz = x_nchw.shape[0]

    def conv(x4d, w, s, bias, res, relu):
        patches = im2col(x4d).astype(bf16)
        wmat = w.reshape(-1, w.shape[-1]).astype(bf16)
        y = jnp.dot(patches, wmat, preferred_element_type=f32) * s[None, :] + bias[None, :]
        if res is not None:
            y = y + res
        return jnp.maximum(y, 0.0) if relu else y

    h0 = conv(x_nhwc, params["w0"], params["s0"], params["b0"], None, True)
    h1 = conv(h0.reshape(bsz, H, W, C1), params["w1"], params["s1"], params["b1"], None, True)
    h2 = conv(h1.reshape(bsz, H, W, C1), params["w2"], params["s2"], params["b2"], h0, True)
    pooled = jnp.mean(h2.reshape(bsz, H * W, C1), axis=1)
    return (jnp.dot(pooled.astype(bf16), params["wf"].astype(bf16),
                    preferred_element_type=f32) + params["bf"][None, :])


if __name__ == "__main__":
    key = jax.random.PRNGKey(0)
    x = jax.random.normal(key, (B, C_IN, H, W), jnp.float32)
    params = make_params()
    wslab, vslab = pack_params(params)

    out = jax.block_until_ready(normalized_resnet_forward(x, wslab, vslab))
    assert out.shape == (B, NUM_CLASSES)

    ref = jax.block_until_ready(reference_forward(x, params))

    # Precision is pinned on both sides (bf16 MXU inputs, f32 accumulation), so the tolerance is
    # FIXED.  The only intentionally non-identical numerics are the pool/FC summation order
    # (kernel: bf16 per-(j,c) row sums @ wf/(H*W); reference: f32 mean then @ wf) and the bf16
    # rounding of h2 before the pooling matmul — both are ~1e-3 on O(0.3) logits.
    np.testing.assert_allclose(np.asarray(out), np.asarray(ref), rtol=2e-2, atol=2e-2)

    print("KERNEL_OK")
</pallas_src>

<mosaic_0001>
module attributes {stable_mosaic.version = 11 : i64} {
  func.func @fused_forward_kernel(%arg0: memref<32x128xf32, #tpu.memory_space<vmem>>, %arg1: memref<1360x128xbf16, #tpu.memory_space<vmem>>, %arg2: memref<16x128xf32, #tpu.memory_space<vmem>>, %arg3: memref<2x128xf32, #tpu.memory_space<vmem>>) attributes {dimension_semantics = [], scalar_prefetch = 0 : i64, scratch_operands = 0 : i64, tpu.core_type = #tpu.core_type<tc>} {
    %c1152 = arith.constant 1152 : index
    %c0 = arith.constant 0 : index
    %0 = vector.load %arg1[%c1152, %c0] : memref<1360x128xbf16, #tpu.memory_space<vmem>>, vector<32x32xbf16>
    %c1184 = arith.constant 1184 : index
    %c0_0 = arith.constant 0 : index
    %1 = vector.load %arg1[%c1184, %c0_0] : memref<1360x128xbf16, #tpu.memory_space<vmem>>, vector<32x32xbf16>
    %c1216 = arith.constant 1216 : index
    %c0_1 = arith.constant 0 : index
    %2 = vector.load %arg1[%c1216, %c0_1] : memref<1360x128xbf16, #tpu.memory_space<vmem>>, vector<2x32xbf16>
    %c1232 = arith.constant 1232 : index
    %c0_2 = arith.constant 0 : index
    %3 = vector.load %arg1[%c1232, %c0_2] : memref<1360x128xbf16, #tpu.memory_space<vmem>>, vector<128x128xbf16>
    %c0_3 = arith.constant 0 : index
    %c0_4 = arith.constant 0 : index
    %4 = vector.load %arg2[%c0_3, %c0_4] : memref<16x128xf32, #tpu.memory_space<vmem>>, vector<1x128xf32>
    %c1 = arith.constant 1 : index
    %c0_5 = arith.constant 0 : index
    %5 = vector.load %arg2[%c1, %c0_5] : memref<16x128xf32, #tpu.memory_space<vmem>>, vector<1x128xf32>
    %c0_6 = arith.constant 0 : index
    %c0_7 = arith.constant 0 : index
    %6 = vector.load %arg0[%c0_6, %c0_7] : memref<32x128xf32, #tpu.memory_space<vmem>>, vector<32x128xf32>
    %7 = vector.broadcast %4 : vector<1x128xf32> to vector<32x128xf32>
    %8 = arith.mulf %6, %7 : vector<32x128xf32>
    %9 = vector.broadcast %5 : vector<1x128xf32> to vector<32x128xf32>
    %10 = arith.addf %8, %9 : vector<32x128xf32>
    %c2 = arith.constant 2 : index
    %c0_8 = arith.constant 0 : index
    %11 = vector.load %arg2[%c2, %c0_8] : memref<16x128xf32, #tpu.memory_space<vmem>>, vector<1x128xf32>
    %c3 = arith.constant 3 : index
    %c0_9 = arith.constant 0 : index
    %12 = vector.load %arg2[%c3, %c0_9] : memref<16x128xf32, #tpu.memory_space<vmem>>, vector<1x128xf32>
    %c0_10 = arith.constant 0 : index
    %c0_11 = arith.constant 0 : index
    %13 = vector.load %arg1[%c0_10, %c0_11] : memref<1360x128xbf16, #tpu.memory_space<vmem>>, vector<384x128xbf16>
    %14 = arith.truncf %10 : vector<32x128xf32> to vector<32x128xbf16>
    %cst = arith.constant dense<0.000000e+00> : vector<32x128xf32>
    %15 = tpu.matmul %0, %14, %cst {dimension_numbers = #tpu.dot_dimension_numbers<[1], [0], [0], [1], [0, 0, 1, 1], [], []>} : vector<32x32xbf16>, vector<32x128xbf16>, vector<32x128xf32> -> vector<32x128xf32>
    %16 = arith.truncf %15 : vector<32x128xf32> to vector<32x128xbf16>
    %cst_12 = arith.constant dense<0.000000e+00> : vector<32x128xf32>
    %17 = tpu.matmul %1, %14, %cst_12 {dimension_numbers = #tpu.dot_dimension_numbers<[1], [0], [0], [1], [0, 0, 1, 1], [], []>} : vector<32x32xbf16>, vector<32x128xbf16>, vector<32x128xf32> -> vector<32x128xf32>
    %18 = arith.truncf %17 : vector<32x128xf32> to vector<32x128xbf16>
    %19 = tpu.concatenate %16, %14, %18 in 1 : vector<32x128xbf16>, vector<32x128xbf16>, vector<32x128xbf16> -> vector<32x384xbf16>
    %cst_13 = arith.constant dense<0.000000e+00> : vector<32x128xf32>
    %20 = tpu.matmul %19, %13, %cst_13 {dimension_numbers = #tpu.dot_dimension_numbers<[1], [0], [0], [1], [0, 0, 1, 1], [], []>} : vector<32x384xbf16>, vector<384x128xbf16>, vector<32x128xf32> -> vector<32x128xf32>
    %21 = vector.broadcast %11 : vector<1x128xf32> to vector<32x128xf32>
    %22 = arith.mulf %20, %21 : vector<32x128xf32>
    %23 = vector.broadcast %12 : vector<1x128xf32> to vector<32x128xf32>
    %24 = arith.addf %22, %23 : vector<32x128xf32>
    %cst_14 = arith.constant 0.000000e+00 : f32
    %25 = vector.broadcast %cst_14 : f32 to vector<32x128xf32>
    %26 = arith.maximumf %24, %25 : vector<32x128xf32>
    %c4 = arith.constant 4 : index
    %c0_15 = arith.constant 0 : index
    %27 = vector.load %arg2[%c4, %c0_15] : memref<16x128xf32, #tpu.memory_space<vmem>>, vector<1x128xf32>
    %c5 = arith.constant 5 : index
    %c0_16 = arith.constant 0 : index
    %28 = vector.load %arg2[%c5, %c0_16] : memref<16x128xf32, #tpu.memory_space<vmem>>, vector<1x128xf32>
    %c384 = arith.constant 384 : index
    %c0_17 = arith.constant 0 : index
    %29 = vector.load %arg1[%c384, %c0_17] : memref<1360x128xbf16, #tpu.memory_space<vmem>>, vector<384x128xbf16>
    %30 = arith.truncf %26 : vector<32x128xf32> to vector<32x128xbf16>
    %cst_18 = arith.constant dense<0.000000e+00> : vector<32x128xf32>
    %31 = tpu.matmul %0, %30, %cst_18 {dimension_numbers = #tpu.dot_dimension_numbers<[1], [0], [0], [1], [0, 0, 1, 1], [], []>} : vector<32x32xbf16>, vector<32x128xbf16>, vector<32x128xf32> -> vector<32x128xf32>
    %32 = arith.truncf %31 : vector<32x128xf32> to vector<32x128xbf16>
    %cst_19 = arith.constant dense<0.000000e+00> : vector<32x128xf32>
    %33 = tpu.matmul %1, %30, %cst_19 {dimension_numbers = #tpu.dot_dimension_numbers<[1], [0], [0], [1], [0, 0, 1, 1], [], []>} : vector<32x32xbf16>, vector<32x128xbf16>, vector<32x128xf32> -> vector<32x128xf32>
    %34 = arith.truncf %33 : vector<32x128xf32> to vector<32x128xbf16>
    %35 = tpu.concatenate %32, %30, %34 in 1 : vector<32x128xbf16>, vector<32x128xbf16>, vector<32x128xbf16> -> vector<32x384xbf16>
    %cst_20 = arith.constant dense<0.000000e+00> : vector<32x128xf32>
    %36 = tpu.matmul %35, %29, %cst_20 {dimension_numbers = #tpu.dot_dimension_numbers<[1], [0], [0], [1], [0, 0, 1, 1], [], []>} : vector<32x384xbf16>, vector<384x128xbf16>, vector<32x128xf32> -> vector<32x128xf32>
    %37 = vector.broadcast %27 : vector<1x128xf32> to vector<32x128xf32>
    %38 = arith.mulf %36, %37 : vector<32x128xf32>
    %39 = vector.broadcast %28 : vector<1x128xf32> to vector<32x128xf32>
    %40 = arith.addf %38, %39 : vector<32x128xf32>
    %cst_21 = arith.constant 0.000000e+00 : f32
    %41 = vector.broadcast %cst_21 : f32 to vector<32x128xf32>
    %42 = arith.maximumf %40, %41 : vector<32x128xf32>
    %c6 = arith.constant 6 : index
    %c0_22 = arith.constant 0 : index
    %43 = vector.load %arg2[%c6, %c0_22] : memref<16x128xf32, #tpu.memory_space<vmem>>, vector<1x128xf32>
    %c7 = arith.constant 7 : index
    %c0_23 = arith.constant 0 : index
    %44 = vector.load %arg2[%c7, %c0_23] : memref<16x128xf32, #tpu.memory_space<vmem>>, vector<1x128xf32>
    %c768 = arith.constant 768 : index
    %c0_24 = arith.constant 0 : index
    %45 = vector.load %arg1[%c768, %c0_24] : memref<1360x128xbf16, #tpu.memory_space<vmem>>, vector<384x128xbf16>
    %46 = arith.truncf %42 : vector<32x128xf32> to vector<32x128xbf16>
    %cst_25 = arith.constant dense<0.000000e+00> : vector<32x128xf32>
    %47 = tpu.matmul %0, %46, %cst_25 {dimension_numbers = #tpu.dot_dimension_numbers<[1], [0], [0], [1], [0, 0, 1, 1], [], []>} : vector<32x32xbf16>, vector<32x128xbf16>, vector<32x128xf32> -> vector<32x128xf32>
    %48 = arith.truncf %47 : vector<32x128xf32> to vector<32x128xbf16>
    %cst_26 = arith.constant dense<0.000000e+00> : vector<32x128xf32>
    %49 = tpu.matmul %1, %46, %cst_26 {dimension_numbers = #tpu.dot_dimension_numbers<[1], [0], [0], [1], [0, 0, 1, 1], [], []>} : vector<32x32xbf16>, vector<32x128xbf16>, vector<32x128xf32> -> vector<32x128xf32>
    %50 = arith.truncf %49 : vector<32x128xf32> to vector<32x128xbf16>
    %51 = tpu.concatenate %48, %46, %50 in 1 : vector<32x128xbf16>, vector<32x128xbf16>, vector<32x128xbf16> -> vector<32x384xbf16>
    %cst_27 = arith.constant dense<0.000000e+00> : vector<32x128xf32>
    %52 = tpu.matmul %51, %45, %cst_27 {dimension_numbers = #tpu.dot_dimension_numbers<[1], [0], [0], [1], [0, 0, 1, 1], [], []>} : vector<32x384xbf16>, vector<384x128xbf16>, vector<32x128xf32> -> vector<32x128xf32>
    %53 = vector.broadcast %43 : vector<1x128xf32> to vector<32x128xf32>
    %54 = arith.mulf %52, %53 : vector<32x128xf32>
    %55 = vector.broadcast %44 : vector<1x128xf32> to vector<32x128xf32>
    %56 = arith.addf %54, %55 : vector<32x128xf32>
    %57 = arith.addf %56, %26 : vector<32x128xf32>
    %cst_28 = arith.constant 0.000000e+00 : f32
    %58 = vector.broadcast %cst_28 : f32 to vector<32x128xf32>
    %59 = arith.maximumf %57, %58 : vector<32x128xf32>
    %60 = arith.truncf %59 : vector<32x128xf32> to vector<32x128xbf16>
    %cst_29 = arith.constant dense<0.000000e+00> : vector<2x128xf32>
    %61 = tpu.matmul %2, %60, %cst_29 {dimension_numbers = #tpu.dot_dimension_numbers<[1], [0], [0], [1], [0, 0, 1, 1], [], []>} : vector<2x32xbf16>, vector<32x128xbf16>, vector<2x128xf32> -> vector<2x128xf32>
    %62 = arith.truncf %61 : vector<2x128xf32> to vector<2x128xbf16>
    %cst_30 = arith.constant dense<0.000000e+00> : vector<2x128xf32>
    %63 = tpu.matmul %62, %3, %cst_30 {dimension_numbers = #tpu.dot_dimension_numbers<[1], [0], [0], [1], [0, 0, 1, 1], [], []>} : vector<2x128xbf16>, vector<128x128xbf16>, vector<2x128xf32> -> vector<2x128xf32>
    %c8 = arith.constant 8 : index
    %c0_31 = arith.constant 0 : index
    %64 = vector.load %arg2[%c8, %c0_31] : memref<16x128xf32, #tpu.memory_space<vmem>>, vector<1x128xf32>
    %65 = vector.broadcast %64 : vector<1x128xf32> to vector<2x128xf32>
    %66 = arith.addf %63, %65 : vector<2x128xf32>
    %c0_32 = arith.constant 0 : index
    %c0_33 = arith.constant 0 : index
    %67 = vector.load %arg3[%c0_32, %c0_33] : memref<2x128xf32, #tpu.memory_space<vmem>>, vector<2x128xf32>
    tpu.vector_store %arg3[%c0_32, %c0_33], %66 {strides = array<i32>} : memref<2x128xf32, #tpu.memory_space<vmem>>, vector<2x128xf32>,
    return
  }
}

</mosaic_0001>

<llo_original>
// kernel: normalized_resnet_forward.1
$region0: #{normalized_resnet_forward.1}
  #allocation0 [shape = 'u32[]', space=smem, size = 0x4, offset = 0x4, fixed_abs, tag = 'smem constant byte address 0x4 - core index']
  #allocation1 [shape = 'u32[144,128]{1,0:T(1,128)}', space=vmem, size = 0x12000, scoped, tag = 'internal scratch']
  %s0 = inlined_call_operand.vmem [shape: f32[32,128], index: 0, kind: input, shape index: {}]
  %s1 = inlined_call_operand.hbm [shape: bf16[1360,128], index: 1, kind: input, shape index: {}]
  %s2 = inlined_call_operand.vmem [shape: f32[16,128], index: 2, kind: input, shape index: {}]
  %s3 = inlined_call_operand.hbm [shape: f32[2,128], index: 3, kind: output, shape index: {}]
  %s4 = sld [smem:[#allocation0]]
  $region26: #{normalized_resnet_forward.1} parent=0
    _
  %s6 = ssub.s32 1, %s4
  %s7 = scalar_select 0, %s6, %s4
  $region1: #{normalized_resnet_forward.1} parent=0
    #allocation2 [shape = 'u8[348160]{0}', space=vmem, size = 0x55000, scoped, tag = 'input window, operand 1, single buffered']
    #allocation3 [shape = 's32[1]{0}', space=sflag, size = 0x4, scoped, tag = 'scoped memory for normalized_resnet_forward.1']
    #allocation4 [shape = 's32[1]{0}', space=sflag, size = 0x4, scoped, tag = 'scoped memory for normalized_resnet_forward.1']
    #allocation5 [shape = 'u8[1024]{0}', space=vmem, size = 0x400, scoped, tag = 'output window, operand 0, single buffered']
    %8 = vsyncpa [#allocation3], 0
    %9 = vsyncpa [#allocation4], 0
    // Predicated region
    $region2: #{normalized_resnet_forward.1} parent=1 // pred_check
      _
    $region3: #{normalized_resnet_forward.1} parent=1 // pred_check_branch
      %11 = sbr.rel (0) target = $region5
    $region4: #{normalized_resnet_forward.1} parent=1 // pred_region
      _
    $region5: #{normalized_resnet_forward.1} parent=1 // pred_fallthru
      _
    // Predicated region
    $region6: #{normalized_resnet_forward.1} parent=1 // pred_check
      _
    $region7: #{normalized_resnet_forward.1} parent=1 // pred_check_branch
      %13 = sbr.rel (0) target = $region9
    $region8: #{normalized_resnet_forward.1} parent=1 // pred_region
      %s15 = ssub.s32 10880, 10880
      %16 = vsyncadd [#allocation3], %s15
      %s17 = sshll.u32 [#allocation2], 4
      %s18 = int_to_ptr.vmem [resolvable:$true] %s17
      %23 = dma.hbm_to_vmem [thread:$0]  %s1, 10880, %s18, [#allocation3], 64, 64, 4
    $region9: #{normalized_resnet_forward.1} parent=1 // pred_fallthru
      _
    // Predicated region
    $region10: #{normalized_resnet_forward.1} parent=1 // pred_check
      _
    $region11: #{normalized_resnet_forward.1} parent=1 // pred_check_branch
      %25 = sbr.rel (0) target = $region13
    $region12: #{normalized_resnet_forward.1} parent=1 // pred_region
      _
    $region13: #{normalized_resnet_forward.1} parent=1 // pred_fallthru
      _
    // Predicated region
    $region14: #{normalized_resnet_forward.1} parent=1 // pred_check
      _
    $region15: #{normalized_resnet_forward.1} parent=1 // pred_check_branch
      %27 = sbr.rel (0) target = $region17
    $region16: #{normalized_resnet_forward.1} parent=1 // pred_region
      %28 = dma.done [#allocation3], 10880
    $region17: #{normalized_resnet_forward.1} parent=1 // pred_fallthru
      _
    %v30 = vld [vmem:[#allocation2 + $0x240] sm:$0xf]
    %v31 = vld [vmem:[#allocation2 + $0x244] sm:$0xf]
    %v32 = vld [vmem:[#allocation2 + $0x248] sm:$0xf]
    %v33 = vld [vmem:[#allocation2 + $0x24c] sm:$0xf]
    %v34 = vld [vmem:[#allocation2 + $0x250] sm:$0xf]
    %v35 = vld [vmem:[#allocation2 + $0x254] sm:$0xf]
    %v36 = vld [vmem:[#allocation2 + $0x258] sm:$0xf]
    %v37 = vld [vmem:[#allocation2 + $0x25c] sm:$0xf]
    %v38 = vld [vmem:[#allocation2 + $0x260] sm:$0x1]
    %v39 = vld [vmem:[#allocation2 + $0x268] sm:$0xf]
    %v40 = vld [vmem:[#allocation2 + $0x26c] sm:$0xf]
    %v41 = vld [vmem:[#allocation2 + $0x270] sm:$0xf]
    %v42 = vld [vmem:[#allocation2 + $0x274] sm:$0xf]
    %v43 = vld [vmem:[#allocation2 + $0x278] sm:$0xf]
    %v44 = vld [vmem:[#allocation2 + $0x27c] sm:$0xf]
    %v45 = vld [vmem:[#allocation2 + $0x280] sm:$0xf]
    %v46 = vld [vmem:[#allocation2 + $0x284] sm:$0xf]
    %v47 = vld [vmem:[#allocation2 + $0x288] sm:$0xf]
    %v48 = vld [vmem:[#allocation2 + $0x28c] sm:$0xf]
    %v49 = vld [vmem:[#allocation2 + $0x290] sm:$0xf]
    %v50 = vld [vmem:[#allocation2 + $0x294] sm:$0xf]
    %v51 = vld [vmem:[#allocation2 + $0x298] sm:$0xf]
    %v52 = vld [vmem:[#allocation2 + $0x29c] sm:$0xf]
    %v53 = vld [vmem:[#allocation2 + $0x2a0] sm:$0xf]
    %v54 = vld [vmem:[#allocation2 + $0x2a4] sm:$0xf]
    %v55 = vld [vmem:[%s2] sm:$0x1]
    %v56 = vld [vmem:[%s2 + $0x1] sm:$0x1]
    %v57 = vld [vmem:[%s0] sm:$0xff]
    %v58 = vld [vmem:[%s0 + $0x8] sm:$0xff]
    %v59 = vld [vmem:[%s0 + $0x10] sm:$0xff]
    %v60 = vld [vmem:[%s0 + $0x18] sm:$0xff]
    %v61 = vlaneseq
    %v62 = vshrl.u32 %v61, 7
    %v63 = vsub.s32 0, %v62
    %v64 = vrot.slane %v55, %v63
    %v65 = vmul.f32 %v57, %v64
    %v66 = vmul.f32 %v58, %v64
    %v67 = vmul.f32 %v59, %v64
    %v68 = vmul.f32 %v60, %v64
    %v69 = vlaneseq
    %v70 = vshrl.u32 %v69, 7
    %v71 = vsub.s32 0, %v70
    %v72 = vrot.slane %v56, %v71
    %v73 = vadd.f32 %v65, %v72
    %v74 = vadd.f32 %v66, %v72
    %v75 = vadd.f32 %v67, %v72
    %v76 = vadd.f32 %v68, %v72
    %v77 = vld [vmem:[%s2 + $0x2] sm:$0x1]
    %v78 = vld [vmem:[%s2 + $0x3] sm:$0x1]
    %v79 = vld [vmem:[#allocation2] sm:$0xf]
    %v80 = vld [vmem:[#allocation2 + $0x4] sm:$0xf]
    %v81 = vld [vmem:[#allocation2 + $0x8] sm:$0xf]
    %v82 = vld [vmem:[#allocation2 + $0xc] sm:$0xf]
    %v83 = vld [vmem:[#allocation2 + $0x10] sm:$0xf]
    %v84 = vld [vmem:[#allocation2 + $0x14] sm:$0xf]
    %v85 = vld [vmem:[#allocation2 + $0x18] sm:$0xf]
    %v86 = vld [vmem:[#allocation2 + $0x1c] sm:$0xf]
    %v87 = vld [vmem:[#allocation2 + $0x20] sm:$0xf]
    %v88 = vld [vmem:[#allocation2 + $0x24] sm:$0xf]
    %v89 = vld [vmem:[#allocation2 + $0x28] sm:$0xf]
    %v90 = vld [vmem:[#allocation2 + $0x2c] sm:$0xf]
    %v91 = vld [vmem:[#allocation2 + $0x30] sm:$0xf]
    %v92 = vld [vmem:[#allocation2 + $0x34] sm:$0xf]
    %v93 = vld [vmem:[#allocation2 + $0x38] sm:$0xf]
    %v94 = vld [vmem:[#allocation2 + $0x3c] sm:$0xf]
    %v95 = vld [vmem:[#allocation2 + $0x40] sm:$0xf]
    %v96 = vld [vmem:[#allocation2 + $0x44] sm:$0xf]
    %v97 = vld [vmem:[#allocation2 + $0x48] sm:$0xf]
    %v98 = vld [vmem:[#allocation2 + $0x4c] sm:$0xf]
    %v99 = vld [vmem:[#allocation2 + $0x50] sm:$0xf]
    %v100 = vld [vmem:[#allocation2 + $0x54] sm:$0xf]
    %v101 = vld [vmem:[#allocation2 + $0x58] sm:$0xf]
    %v102 = vld [vmem:[#allocation2 + $0x5c] sm:$0xf]
    %v103 = vld [vmem:[#allocation2 + $0x60] sm:$0xf]
    %v104 = vld [vmem:[#allocation2 + $0x64] sm:$0xf]
    %v105 = vld [vmem:[#allocation2 + $0x68] sm:$0xf]
    %v106 = vld [vmem:[#allocation2 + $0x6c] sm:$0xf]
    %v107 = vld [vmem:[#allocation2 + $0x70] sm:$0xf]
    %v108 = vld [vmem:[#allocation2 + $0x74] sm:$0xf]
    %v109 = vld [vmem:[#allocation2 + $0x78] sm:$0xf]
    %v110 = vld [vmem:[#allocation2 + $0x7c] sm:$0xf]
    %v111 = vld [vmem:[#allocation2 + $0x80] sm:$0xf]
    %v112 = vld [vmem:[#allocation2 + $0x84] sm:$0xf]
    %v113 = vld [vmem:[#allocation2 + $0x88] sm:$0xf]
    %v114 = vld [vmem:[#allocation2 + $0x8c] sm:$0xf]
    %v115 = vld [vmem:[#allocation2 + $0x90] sm:$0xf]
    %v116 = vld [vmem:[#allocation2 + $0x94] sm:$0xf]
    %v117 = vld [vmem:[#allocation2 + $0x98] sm:$0xf]
    %v118 = vld [vmem:[#allocation2 + $0x9c] sm:$0xf]
    %v119 = vld [vmem:[#allocation2 + $0xa0] sm:$0xf]
    %v120 = vld [vmem:[#allocation2 + $0xa4] sm:$0xf]
    %v121 = vld [vmem:[#allocation2 + $0xa8] sm:$0xf]
    %v122 = vld [vmem:[#allocation2 + $0xac] sm:$0xf]
    %v123 = vld [vmem:[#allocation2 + $0xb0] sm:$0xf]
    %v124 = vld [vmem:[#allocation2 + $0xb4] sm:$0xf]
    %v125 = vld [vmem:[#allocation2 + $0xb8] sm:$0xf]
    %v126 = vld [vmem:[#allocation2 + $0xbc] sm:$0xf]
    %v127 = vpack.c.bf16 %v74, %v73
    %v128 = vpack.c.bf16 %v76, %v75
    %v133 = vunpack.c.l.b16 %v30
    %v134 = vunpack.c.l.b16 %v31
    %v135 = vunpack.c.l.b16 %v32
    %v136 = vunpack.c.l.b16 %v33
    %v137 = vpack.c.b16 %v134, %v133
    %v138 = vpack.c.b16 %v136, %v135
    %vm139 = vcmask 261120
    %v141 = vsel %vm139, %v137, 0
    %v144 = vsel %vm139, %v138, 0
    %146 = vmatprep.subr.bf16.mxu0 0
    %147 = vmatpush1.bf16.msra.mxu0 0
    %148 = vmatprep.subr.bf16.mxu0 0
    %149 = vmatpush1.bf16.msra.mxu0 0
    %150 = vmatprep.subr.bf16.mxu0 0
    %151 = vmatpush1.bf16.msra.mxu0 0
    %152 = vmatprep.subr.bf16.mxu0 0
    %153 = vmatpush1.bf16.msra.mxu0 0
    %154 = vmatprep.subr.bf16.mxu0 0
    %155 = vmatpush1.bf16.msra.mxu0 0
    %156 = vmatprep.subr.bf16.mxu0 0
    %157 = vmatpush1.bf16.msra.mxu0 0
    %158 = vmatprep.subr.bf16.mxu0 0
    %159 = vmatpush1.bf16.msra.mxu0 %v128
    %160 = vmatprep.subr.bf16.mxu0 0
    %161 = vmatpush1.bf16.msra.mxu0 %v127
    %162 = vmatprep.subr.bf16.mxu0 0
    %163 = vmatpush2.bf16.msra.mxu0 0
    %164 = vmatprep.subr.bf16.mxu0 0
    %165 = vmatpush2.bf16.msra.mxu0 0
    %166 = vmatprep.subr.bf16.mxu0 0
    %167 = vmatpush2.bf16.msra.mxu0 0
    %168 = vmatprep.subr.bf16.mxu0 0
    %169 = vmatpush2.bf16.msra.mxu0 0
    %170 = vmatprep.subr.bf16.mxu0 0
    %171 = vmatpush2.bf16.msra.mxu0 0
    %172 = vmatprep.subr.bf16.mxu0 0
    %173 = vmatpush2.bf16.msra.mxu0 0
    %174 = vmatprep.subr.bf16.mxu0 0
    %175 = vmatpush2.bf16.msra.mxu0 0
    %176 = vmatprep.subr.bf16.mxu0 0
    %177 = vmatpush2.bf16.msra.mxu0 0
    %178 = vmatprep.mubr.bf16.mxu0 0
    %179 = vmatmul.mubr.bf16.gmra.mxu0 %v141
    %v180 = vpop.f32.mrf.mxu0
    %v181 = vadd.f32 0.0, %v180
    %v182 = vpop.f32.mrf.mxu0
    %v183 = vpop.f32.mrf.mxu0
    %v184 = vadd.f32 0.0, %v183
    %v185 = vpop.f32.mrf.mxu0
    %186 = vmatprep.mubr.bf16.mxu0 0
    %187 = vmatmul.mubr.bf16.gmra.mxu0 %v144
    %v188 = vpop.f32.mrf.mxu0
    %v189 = vadd.f32 0.0, %v188
    %v190 = vpop.f32.mrf.mxu0
    %v191 = vpop.f32.mrf.mxu0
    %v192 = vadd.f32 0.0, %v191
    %v193 = vpop.f32.mrf.mxu0
    %194 = vdwg.mxu0
    %v195 = vpack.c.bf16 %v184, %v181
    %v196 = vpack.c.bf16 %v192, %v189
    %v201 = vunpack.c.l.b16 %v34
    %v202 = vunpack.c.l.b16 %v35
    %v203 = vunpack.c.l.b16 %v36
    %v204 = vunpack.c.l.b16 %v37
    %v205 = vpack.c.b16 %v202, %v201
    %v206 = vpack.c.b16 %v204, %v203
    %v208 = vsel %vm139, %v205, 0
    %v211 = vsel %vm139, %v206, 0
    %213 = vmatprep.subr.bf16.mxu0 0
    %214 = vmatpush1.bf16.msra.mxu0 0
    %215 = vmatprep.subr.bf16.mxu0 0
    %216 = vmatpush1.bf16.msra.mxu0 0
    %217 = vmatprep.subr.bf16.mxu0 0
    %218 = vmatpush1.bf16.msra.mxu0 0
    %219 = vmatprep.subr.bf16.mxu0 0
    %220 = vmatpush1.bf16.msra.mxu0 0
    %221 = vmatprep.subr.bf16.mxu0 0
    %222 = vmatpush1.bf16.msra.mxu0 0
    %223 = vmatprep.subr.bf16.mxu0 0
    %224 = vmatpush1.bf16.msra.mxu0 0
    %225 = vmatprep.subr.bf16.mxu0 0
    %226 = vmatpush1.bf16.msra.mxu0 %v128
    %227 = vmatprep.subr.bf16.mxu0 0
    %228 = vmatpush1.bf16.msra.mxu0 %v127
    %229 = vmatprep.subr.bf16.mxu0 0
    %230 = vmatpush2.bf16.msra.mxu0 0
    %231 = vmatprep.subr.bf16.mxu0 0
    %232 = vmatpush2.bf16.msra.mxu0 0
    %233 = vmatprep.subr.bf16.mxu0 0
    %234 = vmatpush2.bf16.msra.mxu0 0
    %235 = vmatprep.subr.bf16.mxu0 0
    %236 = vmatpush2.bf16.msra.mxu0 0
    %237 = vmatprep.subr.bf16.mxu0 0
    %238 = vmatpush2.bf16.msra.mxu0 0
    %239 = vmatprep.subr.bf16.mxu0 0
    %240 = vmatpush2.bf16.msra.mxu0 0
    %241 = vmatprep.subr.bf16.mxu0 0
    %242 = vmatpush2.bf16.msra.mxu0 0
    %243 = vmatprep.subr.bf16.mxu0 0
    %244 = vmatpush2.bf16.msra.mxu0 0
    %245 = vmatprep.mubr.bf16.mxu0 0
    %246 = vmatmul.mubr.bf16.gmra.mxu0 %v208
    %v247 = vpop.f32.mrf.mxu0
    %v248 = vadd.f32 0.0, %v247
    %v249 = vpop.f32.mrf.mxu0
    %v250 = vpop.f32.mrf.mxu0
    %v251 = vadd.f32 0.0, %v250
    %v252 = vpop.f32.mrf.mxu0
    %253 = vmatprep.mubr.bf16.mxu0 0
    %254 = vmatmul.mubr.bf16.gmra.mxu0 %v211
    %v255 = vpop.f32.mrf.mxu0
    %v256 = vadd.f32 0.0, %v255
    %v257 = vpop.f32.mrf.mxu0
    %v258 = vpop.f32.mrf.mxu0
    %v259 = vadd.f32 0.0, %v258
    %v260 = vpop.f32.mrf.mxu0
    %261 = vdwg.mxu0
    %v262 = vpack.c.bf16 %v251, %v248
    %v263 = vpack.c.bf16 %v259, %v256
    %v312 = vunpack.c.l.b16 %v79
    %v313 = vunpack.c.l.b16 %v80
    %v314 = vunpack.c.l.b16 %v81
    %v315 = vunpack.c.l.b16 %v82
    %v316 = vunpack.c.l.b16 %v83
    %v317 = vunpack.c.l.b16 %v84
    %v318 = vunpack.c.l.b16 %v85
    %v319 = vunpack.c.l.b16 %v86
    %v320 = vunpack.c.l.b16 %v87
    %v321 = vunpack.c.l.b16 %v88
    %v322 = vunpack.c.l.b16 %v89
    %v323 = vunpack.c.l.b16 %v90
    %v324 = vunpack.c.l.b16 %v91
    %v325 = vunpack.c.l.b16 %v92
    %v326 = vunpack.c.l.b16 %v93
    %v327 = vunpack.c.l.b16 %v94
    %v328 = vunpack.c.l.b16 %v95
    %v329 = vunpack.c.l.b16 %v96
    %v330 = vunpack.c.l.b16 %v97
    %v331 = vunpack.c.l.b16 %v98
    %v332 = vunpack.c.l.b16 %v99
    %v333 = vunpack.c.l.b16 %v100
    %v334 = vunpack.c.l.b16 %v101
    %v335 = vunpack.c.l.b16 %v102
    %v336 = vunpack.c.l.b16 %v103
    %v337 = vunpack.c.l.b16 %v104
    %v338 = vunpack.c.l.b16 %v105
    %v339 = vunpack.c.l.b16 %v106
    %v340 = vunpack.c.l.b16 %v107
    %v341 = vunpack.c.l.b16 %v108
    %v342 = vunpack.c.l.b16 %v109
    %v343 = vunpack.c.l.b16 %v110
    %v344 = vunpack.c.l.b16 %v111
    %v345 = vunpack.c.l.b16 %v112
    %v346 = vunpack.c.l.b16 %v113
    %v347 = vunpack.c.l.b16 %v114
    %v348 = vunpack.c.l.b16 %v115
    %v349 = vunpack.c.l.b16 %v116
    %v350 = vunpack.c.l.b16 %v117
    %v351 = vunpack.c.l.b16 %v118
    %v352 = vunpack.c.l.b16 %v119
    %v353 = vunpack.c.l.b16 %v120
    %v354 = vunpack.c.l.b16 %v121
    %v355 = vunpack.c.l.b16 %v122
    %v356 = vunpack.c.l.b16 %v123
    %v357 = vunpack.c.l.b16 %v124
    %v358 = vunpack.c.l.b16 %v125
    %v359 = vunpack.c.l.b16 %v126
    %v360 = vpack.c.b16 %v313, %v312
    %v361 = vpack.c.b16 %v315, %v314
    %v362 = vpack.c.b16 %v317, %v316
    %v363 = vpack.c.b16 %v319, %v318
    %v364 = vpack.c.b16 %v321, %v320
    %v365 = vpack.c.b16 %v323, %v322
    %v366 = vpack.c.b16 %v325, %v324
    %v367 = vpack.c.b16 %v327, %v326
    %v368 = vpack.c.b16 %v329, %v328
    %v369 = vpack.c.b16 %v331, %v330
    %v370 = vpack.c.b16 %v333, %v332
    %v371 = vpack.c.b16 %v335, %v334
    %v372 = vpack.c.b16 %v337, %v336
    %v373 = vpack.c.b16 %v339, %v338
    %v374 = vpack.c.b16 %v341, %v340
    %v375 = vpack.c.b16 %v343, %v342
    %v376 = vpack.c.b16 %v345, %v344
    %v377 = vpack.c.b16 %v347, %v346
    %v378 = vpack.c.b16 %v349, %v348
    %v379 = vpack.c.b16 %v351, %v350
    %v380 = vpack.c.b16 %v353, %v352
    %v381 = vpack.c.b16 %v355, %v354
    %v382 = vpack.c.b16 %v357, %v356
    %v383 = vpack.c.b16 %v359, %v358
    %408 = vmatprep.subr.bf16.mxu0 0
    %409 = vmatpush1.bf16.msra.mxu0 %v367
    %410 = vmatprep.subr.bf16.mxu0 0
    %411 = vmatpush1.bf16.msra.mxu0 %v366
    %412 = vmatprep.subr.bf16.mxu0 0
    %413 = vmatpush1.bf16.msra.mxu0 %v365
    %414 = vmatprep.subr.bf16.mxu0 0
    %415 = vmatpush1.bf16.msra.mxu0 %v364
    %416 = vmatprep.subr.bf16.mxu0 0
    %417 = vmatpush1.bf16.msra.mxu0 %v363
    %418 = vmatprep.subr.bf16.mxu0 0
    %419 = vmatpush1.bf16.msra.mxu0 %v362
    %420 = vmatprep.subr.bf16.mxu0 0
    %421 = vmatpush1.bf16.msra.mxu0 %v361
    %422 = vmatprep.subr.bf16.mxu0 0
    %423 = vmatpush1.bf16.msra.mxu0 %v360
    %424 = vmatprep.subr.bf16.mxu0 0
    %425 = vmatpush2.bf16.msra.mxu0 %v375
    %426 = vmatprep.subr.bf16.mxu0 0
    %427 = vmatpush2.bf16.msra.mxu0 %v374
    %428 = vmatprep.subr.bf16.mxu0 0
    %429 = vmatpush2.bf16.msra.mxu0 %v373
    %430 = vmatprep.subr.bf16.mxu0 0
    %431 = vmatpush2.bf16.msra.mxu0 %v372
    %432 = vmatprep.subr.bf16.mxu0 0
    %433 = vmatpush2.bf16.msra.mxu0 %v371
    %434 = vmatprep.subr.bf16.mxu0 0
    %435 = vmatpush2.bf16.msra.mxu0 %v370
    %436 = vmatprep.subr.bf16.mxu0 0
    %437 = vmatpush2.bf16.msra.mxu0 %v369
    %438 = vmatprep.subr.bf16.mxu0 0
    %439 = vmatpush2.bf16.msra.mxu0 %v368
    %440 = vmatprep.mubr.bf16.mxu0 %v127
    %441 = vmatmul.mubr.bf16.gmra.mxu0 %v195
    %v442 = vpop.f32.mrf.mxu0
    %v443 = vadd.f32 0.0, %v442
    %v444 = vpop.f32.mrf.mxu0
    %v445 = vpop.f32.mrf.mxu0
    %v446 = vadd.f32 0.0, %v445
    %v447 = vpop.f32.mrf.mxu0
    %448 = vmatprep.mubr.bf16.mxu0 %v128
    %449 = vmatmul.mubr.bf16.gmra.mxu0 %v196
    %v450 = vpop.f32.mrf.mxu0
    %v451 = vadd.f32 0.0, %v450
    %v452 = vpop.f32.mrf.mxu0
    %v453 = vpop.f32.mrf.mxu0
    %v454 = vadd.f32 0.0, %v453
    %v455 = vpop.f32.mrf.mxu0
    %456 = vdwg.mxu0
    %457 = vmatprep.subr.bf16.mxu0 0
    %458 = vmatpush1.bf16.msra.mxu0 %v383
    %459 = vmatprep.subr.bf16.mxu0 0
    %460 = vmatpush1.bf16.msra.mxu0 %v382
    %461 = vmatprep.subr.bf16.mxu0 0
    %462 = vmatpush1.bf16.msra.mxu0 %v381
    %463 = vmatprep.subr.bf16.mxu0 0
    %464 = vmatpush1.bf16.msra.mxu0 %v380
    %465 = vmatprep.subr.bf16.mxu0 0
    %466 = vmatpush1.bf16.msra.mxu0 %v379
    %467 = vmatprep.subr.bf16.mxu0 0
    %468 = vmatpush1.bf16.msra.mxu0 %v378
    %469 = vmatprep.subr.bf16.mxu0 0
    %470 = vmatpush1.bf16.msra.mxu0 %v377
    %471 = vmatprep.subr.bf16.mxu0 0
    %472 = vmatpush1.bf16.msra.mxu0 %v376
    %473 = vmatprep.subr.bf16.mxu0 0
    %474 = vmatpush2.bf16.msra.mxu0 0
    %475 = vmatprep.subr.bf16.mxu0 0
    %476 = vmatpush2.bf16.msra.mxu0 0
    %477 = vmatprep.subr.bf16.mxu0 0
    %478 = vmatpush2.bf16.msra.mxu0 0
    %479 = vmatprep.subr.bf16.mxu0 0
    %480 = vmatpush2.bf16.msra.mxu0 0
    %481 = vmatprep.subr.bf16.mxu0 0
    %482 = vmatpush2.bf16.msra.mxu0 0
    %483 = vmatprep.subr.bf16.mxu0 0
    %484 = vmatpush2.bf16.msra.mxu0 0
    %485 = vmatprep.subr.bf16.mxu0 0
    %486 = vmatpush2.bf16.msra.mxu0 0
    %487 = vmatprep.subr.bf16.mxu0 0
    %488 = vmatpush2.bf16.msra.mxu0 0
    %489 = vmatprep.mubr.bf16.mxu0 0
    %490 = vmatmul.mubr.bf16.gmra.mxu0 %v262
    %v491 = vpop.f32.mrf.mxu0
    %v492 = vadd.f32 %v443, %v491
    %v493 = vpop.f32.mrf.mxu0
    %v494 = vpop.f32.mrf.mxu0
    %v495 = vadd.f32 %v446, %v494
    %v496 = vpop.f32.mrf.mxu0
    %497 = vmatprep.mubr.bf16.mxu0 0
    %498 = vmatmul.mubr.bf16.gmra.mxu0 %v263
    %v499 = vpop.f32.mrf.mxu0
    %v500 = vadd.f32 %v451, %v499
    %v501 = vpop.f32.mrf.mxu0
    %v502 = vpop.f32.mrf.mxu0
    %v503 = vadd.f32 %v454, %v502
    %v504 = vpop.f32.mrf.mxu0
    %505 = vdwg.mxu0
    %v506 = vlaneseq
    %v507 = vshrl.u32 %v506, 7
    %v508 = vsub.s32 0, %v507
    %v509 = vrot.slane %v77, %v508
    %v510 = vmul.f32 %v492, %v509
    %v511 = vmul.f32 %v495, %v509
    %v512 = vmul.f32 %v500, %v509
    %v513 = vmul.f32 %v503, %v509
    %v514 = vlaneseq
    %v515 = vshrl.u32 %v514, 7
    %v516 = vsub.s32 0, %v515
    %v517 = vrot.slane %v78, %v516
    %v518 = vadd.f32 %v510, %v517
    %v519 = vadd.f32 %v511, %v517
    %v520 = vadd.f32 %v512, %v517
    %v521 = vadd.f32 %v513, %v517
    %v522 = vmax.f32 %v518, 0.0
    %v523 = vmax.f32 %v519, 0.0
    %v524 = vmax.f32 %v520, 0.0
    %v525 = vmax.f32 %v521, 0.0
    %v526 = vld [vmem:[%s2 + $0x4] sm:$0x1]
    %v527 = vld [vmem:[%s2 + $0x5] sm:$0x1]
    %v528 = vld [vmem:[#allocation2 + $0xc0] sm:$0xf]
    %v529 = vld [vmem:[#allocation2 + $0xc4] sm:$0xf]
    %v530 = vld [vmem:[#allocation2 + $0xc8] sm:$0xf]
    %v531 = vld [vmem:[#allocation2 + $0xcc] sm:$0xf]
    %v532 = vld [vmem:[#allocation2 + $0xd0] sm:$0xf]
    %v533 = vld [vmem:[#allocation2 + $0xd4] sm:$0xf]
    %v534 = vld [vmem:[#allocation2 + $0xd8] sm:$0xf]
    %v535 = vld [vmem:[#allocation2 + $0xdc] sm:$0xf]
    %v536 = vld [vmem:[#allocation2 + $0xe0] sm:$0xf]
    %v537 = vld [vmem:[#allocation2 + $0xe4] sm:$0xf]
    %v538 = vld [vmem:[#allocation2 + $0xe8] sm:$0xf]
    %v539 = vld [vmem:[#allocation2 + $0xec] sm:$0xf]
    %v540 = vld [vmem:[#allocation2 + $0xf0] sm:$0xf]
    %v541 = vld [vmem:[#allocation2 + $0xf4] sm:$0xf]
    %v542 = vld [vmem:[#allocation2 + $0xf8] sm:$0xf]
    %v543 = vld [vmem:[#allocation2 + $0xfc] sm:$0xf]
    %v544 = vld [vmem:[#allocation2 + $0x100] sm:$0xf]
    %v545 = vld [vmem:[#allocation2 + $0x104] sm:$0xf]
    %v546 = vld [vmem:[#allocation2 + $0x108] sm:$0xf]
    %v547 = vld [vmem:[#allocation2 + $0x10c] sm:$0xf]
    %v548 = vld [vmem:[#allocation2 + $0x110] sm:$0xf]
    %v549 = vld [vmem:[#allocation2 + $0x114] sm:$0xf]
    %v550 = vld [vmem:[#allocation2 + $0x118] sm:$0xf]
    %v551 = vld [vmem:[#allocation2 + $0x11c] sm:$0xf]
    %v552 = vld [vmem:[#allocation2 + $0x120] sm:$0xf]
    %v553 = vld [vmem:[#allocation2 + $0x124] sm:$0xf]
    %v554 = vld [vmem:[#allocation2 + $0x128] sm:$0xf]
    %v555 = vld [vmem:[#allocation2 + $0x12c] sm:$0xf]
    %v556 = vld [vmem:[#allocation2 + $0x130] sm:$0xf]
    %v557 = vld [vmem:[#allocation2 + $0x134] sm:$0xf]
    %v558 = vld [vmem:[#allocation2 + $0x138] sm:$0xf]
    %v559 = vld [vmem:[#allocation2 + $0x13c] sm:$0xf]
    %v560 = vld [vmem:[#allocation2 + $0x140] sm:$0xf]
    %v561 = vld [vmem:[#allocation2 + $0x144] sm:$0xf]
    %v562 = vld [vmem:[#allocation2 + $0x148] sm:$0xf]
    %v563 = vld [vmem:[#allocation2 + $0x14c] sm:$0xf]
    %v564 = vld [vmem:[#allocation2 + $0x150] sm:$0xf]
    %v565 = vld [vmem:[#allocation2 + $0x154] sm:$0xf]
    %v566 = vld [vmem:[#allocation2 + $0x158] sm:$0xf]
    %v567 = vld [vmem:[#allocation2 + $0x15c] sm:$0xf]
    %v568 = vld [vmem:[#allocation2 + $0x160] sm:$0xf]
    %v569 = vld [vmem:[#allocation2 + $0x164] sm:$0xf]
    %v570 = vld [vmem:[#allocation2 + $0x168] sm:$0xf]
    %v571 = vld [vmem:[#allocation2 + $0x16c] sm:$0xf]
    %v572 = vld [vmem:[#allocation2 + $0x170] sm:$0xf]
    %v573 = vld [vmem:[#allocation2 + $0x174] sm:$0xf]
    %v574 = vld [vmem:[#allocation2 + $0x178] sm:$0xf]
    %v575 = vld [vmem:[#allocation2 + $0x17c] sm:$0xf]
    %v576 = vpack.c.bf16 %v523, %v522
    %v577 = vpack.c.bf16 %v525, %v524
    %578 = vmatprep.subr.bf16.mxu0 0
    %579 = vmatpush1.bf16.msra.mxu0 0
    %580 = vmatprep.subr.bf16.mxu0 0
    %581 = vmatpush1.bf16.msra.mxu0 0
    %582 = vmatprep.subr.bf16.mxu0 0
    %583 = vmatpush1.bf16.msra.mxu0 0
    %584 = vmatprep.subr.bf16.mxu0 0
    %585 = vmatpush1.bf16.msra.mxu0 0
    %586 = vmatprep.subr.bf16.mxu0 0
    %587 = vmatpush1.bf16.msra.mxu0 0
    %588 = vmatprep.subr.bf16.mxu0 0
    %589 = vmatpush1.bf16.msra.mxu0 0
    %590 = vmatprep.subr.bf16.mxu0 0
    %591 = vmatpush1.bf16.msra.mxu0 %v577
    %592 = vmatprep.subr.bf16.mxu0 0
    %593 = vmatpush1.bf16.msra.mxu0 %v576
    %594 = vmatprep.subr.bf16.mxu0 0
    %595 = vmatpush2.bf16.msra.mxu0 0
    %596 = vmatprep.subr.bf16.mxu0 0
    %597 = vmatpush2.bf16.msra.mxu0 0
    %598 = vmatprep.subr.bf16.mxu0 0
    %599 = vmatpush2.bf16.msra.mxu0 0
    %600 = vmatprep.subr.bf16.mxu0 0
    %601 = vmatpush2.bf16.msra.mxu0 0
    %602 = vmatprep.subr.bf16.mxu0 0
    %603 = vmatpush2.bf16.msra.mxu0 0
    %604 = vmatprep.subr.bf16.mxu0 0
    %605 = vmatpush2.bf16.msra.mxu0 0
    %606 = vmatprep.subr.bf16.mxu0 0
    %607 = vmatpush2.bf16.msra.mxu0 0
    %608 = vmatprep.subr.bf16.mxu0 0
    %609 = vmatpush2.bf16.msra.mxu0 0
    %610 = vmatprep.mubr.bf16.mxu0 0
    %611 = vmatmul.mubr.bf16.gmra.mxu0 %v141
    %v612 = vpop.f32.mrf.mxu0
    %v613 = vadd.f32 0.0, %v612
    %v614 = vpop.f32.mrf.mxu0
    %v615 = vpop.f32.mrf.mxu0
    %v616 = vadd.f32 0.0, %v615
    %v617 = vpop.f32.mrf.mxu0
    %618 = vmatprep.mubr.bf16.mxu0 0
    %619 = vmatmul.mubr.bf16.gmra.mxu0 %v144
    %v620 = vpop.f32.mrf.mxu0
    %v621 = vadd.f32 0.0, %v620
    %v622 = vpop.f32.mrf.mxu0
    %v623 = vpop.f32.mrf.mxu0
    %v624 = vadd.f32 0.0, %v623
    %v625 = vpop.f32.mrf.mxu0
    %626 = vdwg.mxu0
    %v627 = vpack.c.bf16 %v616, %v613
    %v628 = vpack.c.bf16 %v624, %v621
    %629 = vmatprep.subr.bf16.mxu0 0
    %630 = vmatpush1.bf16.msra.mxu0 0
    %631 = vmatprep.subr.bf16.mxu0 0
    %632 = vmatpush1.bf16.msra.mxu0 0
    %633 = vmatprep.subr.bf16.mxu0 0
    %634 = vmatpush1.bf16.msra.mxu0 0
    %635 = vmatprep.subr.bf16.mxu0 0
    %636 = vmatpush1.bf16.msra.mxu0 0
    %637 = vmatprep.subr.bf16.mxu0 0
    %638 = vmatpush1.bf16.msra.mxu0 0
    %639 = vmatprep.subr.bf16.mxu0 0
    %640 = vmatpush1.bf16.msra.mxu0 0
    %641 = vmatprep.subr.bf16.mxu0 0
    %642 = vmatpush1.bf16.msra.mxu0 %v577
    %643 = vmatprep.subr.bf16.mxu0 0
    %644 = vmatpush1.bf16.msra.mxu0 %v576
    %645 = vmatprep.subr.bf16.mxu0 0
    %646 = vmatpush2.bf16.msra.mxu0 0
    %647 = vmatprep.subr.bf16.mxu0 0
    %648 = vmatpush2.bf16.msra.mxu0 0
    %649 = vmatprep.subr.bf16.mxu0 0
    %650 = vmatpush2.bf16.msra.mxu0 0
    %651 = vmatprep.subr.bf16.mxu0 0
    %652 = vmatpush2.bf16.msra.mxu0 0
    %653 = vmatprep.subr.bf16.mxu0 0
    %654 = vmatpush2.bf16.msra.mxu0 0
    %655 = vmatprep.subr.bf16.mxu0 0
    %656 = vmatpush2.bf16.msra.mxu0 0
    %657 = vmatprep.subr.bf16.mxu0 0
    %658 = vmatpush2.bf16.msra.mxu0 0
    %659 = vmatprep.subr.bf16.mxu0 0
    %660 = vmatpush2.bf16.msra.mxu0 0
    %661 = vmatprep.mubr.bf16.mxu0 0
    %662 = vmatmul.mubr.bf16.gmra.mxu0 %v208
    %v663 = vpop.f32.mrf.mxu0
    %v664 = vadd.f32 0.0, %v663
    %v665 = vpop.f32.mrf.mxu0
    %v666 = vpop.f32.mrf.mxu0
    %v667 = vadd.f32 0.0, %v666
    %v668 = vpop.f32.mrf.mxu0
    %669 = vmatprep.mubr.bf16.mxu0 0
    %670 = vmatmul.mubr.bf16.gmra.mxu0 %v211
    %v671 = vpop.f32.mrf.mxu0
    %v672 = vadd.f32 0.0, %v671
    %v673 = vpop.f32.mrf.mxu0
    %v674 = vpop.f32.mrf.mxu0
    %v675 = vadd.f32 0.0, %v674
    %v676 = vpop.f32.mrf.mxu0
    %677 = vdwg.mxu0
    %v678 = vpack.c.bf16 %v667, %v664
    %v679 = vpack.c.bf16 %v675, %v672
    %v728 = vunpack.c.l.b16 %v528
    %v729 = vunpack.c.l.b16 %v529
    %v730 = vunpack.c.l.b16 %v530
    %v731 = vunpack.c.l.b16 %v531
    %v732 = vunpack.c.l.b16 %v532
    %v733 = vunpack.c.l.b16 %v533
    %v734 = vunpack.c.l.b16 %v534
    %v735 = vunpack.c.l.b16 %v535
    %v736 = vunpack.c.l.b16 %v536
    %v737 = vunpack.c.l.b16 %v537
    %v738 = vunpack.c.l.b16 %v538
    %v739 = vunpack.c.l.b16 %v539
    %v740 = vunpack.c.l.b16 %v540
    %v741 = vunpack.c.l.b16 %v541
    %v742 = vunpack.c.l.b16 %v542
    %v743 = vunpack.c.l.b16 %v543
    %v744 = vunpack.c.l.b16 %v544
    %v745 = vunpack.c.l.b16 %v545
    %v746 = vunpack.c.l.b16 %v546
    %v747 = vunpack.c.l.b16 %v547
    %v748 = vunpack.c.l.b16 %v548
    %v749 = vunpack.c.l.b16 %v549
    %v750 = vunpack.c.l.b16 %v550
    %v751 = vunpack.c.l.b16 %v551
    %v752 = vunpack.c.l.b16 %v552
    %v753 = vunpack.c.l.b16 %v553
    %v754 = vunpack.c.l.b16 %v554
    %v755 = vunpack.c.l.b16 %v555
    %v756 = vunpack.c.l.b16 %v556
    %v757 = vunpack.c.l.b16 %v557
    %v758 = vunpack.c.l.b16 %v558
    %v759 = vunpack.c.l.b16 %v559
    %v760 = vunpack.c.l.b16 %v560
    %v761 = vunpack.c.l.b16 %v561
    %v762 = vunpack.c.l.b16 %v562
    %v763 = vunpack.c.l.b16 %v563
    %v764 = vunpack.c.l.b16 %v564
    %v765 = vunpack.c.l.b16 %v565
    %v766 = vunpack.c.l.b16 %v566
    %v767 = vunpack.c.l.b16 %v567
    %v768 = vunpack.c.l.b16 %v568
    %v769 = vunpack.c.l.b16 %v569
    %v770 = vunpack.c.l.b16 %v570
    %v771 = vunpack.c.l.b16 %v571
    %v772 = vunpack.c.l.b16 %v572
    %v773 = vunpack.c.l.b16 %v573
    %v774 = vunpack.c.l.b16 %v574
    %v775 = vunpack.c.l.b16 %v575
    %v776 = vpack.c.b16 %v729, %v728
    %v777 = vpack.c.b16 %v731, %v730
    %v778 = vpack.c.b16 %v733, %v732
    %v779 = vpack.c.b16 %v735, %v734
    %v780 = vpack.c.b16 %v737, %v736
    %v781 = vpack.c.b16 %v739, %v738
    %v782 = vpack.c.b16 %v741, %v740
    %v783 = vpack.c.b16 %v743, %v742
    %v784 = vpack.c.b16 %v745, %v744
    %v785 = vpack.c.b16 %v747, %v746
    %v786 = vpack.c.b16 %v749, %v748
    %v787 = vpack.c.b16 %v751, %v750
    %v788 = vpack.c.b16 %v753, %v752
    %v789 = vpack.c.b16 %v755, %v754
    %v790 = vpack.c.b16 %v757, %v756
    %v791 = vpack.c.b16 %v759, %v758
    %v792 = vpack.c.b16 %v761, %v760
    %v793 = vpack.c.b16 %v763, %v762
    %v794 = vpack.c.b16 %v765, %v764
    %v795 = vpack.c.b16 %v767, %v766
    %v796 = vpack.c.b16 %v769, %v768
    %v797 = vpack.c.b16 %v771, %v770
    %v798 = vpack.c.b16 %v773, %v772
    %v799 = vpack.c.b16 %v775, %v774
    %824 = vmatprep.subr.bf16.mxu0 0
    %825 = vmatpush1.bf16.msra.mxu0 %v783
    %826 = vmatprep.subr.bf16.mxu0 0
    %827 = vmatpush1.bf16.msra.mxu0 %v782
    %828 = vmatprep.subr.bf16.mxu0 0
    %829 = vmatpush1.bf16.msra.mxu0 %v781
    %830 = vmatprep.subr.bf16.mxu0 0
    %831 = vmatpush1.bf16.msra.mxu0 %v780
    %832 = vmatprep.subr.bf16.mxu0 0
    %833 = vmatpush1.bf16.msra.mxu0 %v779
    %834 = vmatprep.subr.bf16.mxu0 0
    %835 = vmatpush1.bf16.msra.mxu0 %v778
    %836 = vmatprep.subr.bf16.mxu0 0
    %837 = vmatpush1.bf16.msra.mxu0 %v777
    %838 = vmatprep.subr.bf16.mxu0 0
    %839 = vmatpush1.bf16.msra.mxu0 %v776
    %840 = vmatprep.subr.bf16.mxu0 0
    %841 = vmatpush2.bf16.msra.mxu0 %v791
    %842 = vmatprep.subr.bf16.mxu0 0
    %843 = vmatpush2.bf16.msra.mxu0 %v790
    %844 = vmatprep.subr.bf16.mxu0 0
    %845 = vmatpush2.bf16.msra.mxu0 %v789
    %846 = vmatprep.subr.bf16.mxu0 0
    %847 = vmatpush2.bf16.msra.mxu0 %v788
    %848 = vmatprep.subr.bf16.mxu0 0
    %849 = vmatpush2.bf16.msra.mxu0 %v787
    %850 = vmatprep.subr.bf16.mxu0 0
    %851 = vmatpush2.bf16.msra.mxu0 %v786
    %852 = vmatprep.subr.bf16.mxu0 0
    %853 = vmatpush2.bf16.msra.mxu0 %v785
    %854 = vmatprep.subr.bf16.mxu0 0
    %855 = vmatpush2.bf16.msra.mxu0 %v784
    %856 = vmatprep.mubr.bf16.mxu0 %v576
    %857 = vmatmul.mubr.bf16.gmra.mxu0 %v627
    %v858 = vpop.f32.mrf.mxu0
    %v859 = vadd.f32 0.0, %v858
    %v860 = vpop.f32.mrf.mxu0
    %v861 = vpop.f32.mrf.mxu0
    %v862 = vadd.f32 0.0, %v861
    %v863 = vpop.f32.mrf.mxu0
    %864 = vmatprep.mubr.bf16.mxu0 %v577
    %865 = vmatmul.mubr.bf16.gmra.mxu0 %v628
    %v866 = vpop.f32.mrf.mxu0
    %v867 = vadd.f32 0.0, %v866
    %v868 = vpop.f32.mrf.mxu0
    %v869 = vpop.f32.mrf.mxu0
    %v870 = vadd.f32 0.0, %v869
    %v871 = vpop.f32.mrf.mxu0
    %872 = vdwg.mxu0
    %873 = vmatprep.subr.bf16.mxu0 0
    %874 = vmatpush1.bf16.msra.mxu0 %v799
    %875 = vmatprep.subr.bf16.mxu0 0
    %876 = vmatpush1.bf16.msra.mxu0 %v798
    %877 = vmatprep.subr.bf16.mxu0 0
    %878 = vmatpush1.bf16.msra.mxu0 %v797
    %879 = vmatprep.subr.bf16.mxu0 0
    %880 = vmatpush1.bf16.msra.mxu0 %v796
    %881 = vmatprep.subr.bf16.mxu0 0
    %882 = vmatpush1.bf16.msra.mxu0 %v795
    %883 = vmatprep.subr.bf16.mxu0 0
    %884 = vmatpush1.bf16.msra.mxu0 %v794
    %885 = vmatprep.subr.bf16.mxu0 0
    %886 = vmatpush1.bf16.msra.mxu0 %v793
    %887 = vmatprep.subr.bf16.mxu0 0
    %888 = vmatpush1.bf16.msra.mxu0 %v792
    %889 = vmatprep.subr.bf16.mxu0 0
    %890 = vmatpush2.bf16.msra.mxu0 0
    %891 = vmatprep.subr.bf16.mxu0 0
    %892 = vmatpush2.bf16.msra.mxu0 0
    %893 = vmatprep.subr.bf16.mxu0 0
    %894 = vmatpush2.bf16.msra.mxu0 0
    %895 = vmatprep.subr.bf16.mxu0 0
    %896 = vmatpush2.bf16.msra.mxu0 0
    %897 = vmatprep.subr.bf16.mxu0 0
    %898 = vmatpush2.bf16.msra.mxu0 0
    %899 = vmatprep.subr.bf16.mxu0 0
    %900 = vmatpush2.bf16.msra.mxu0 0
    %901 = vmatprep.subr.bf16.mxu0 0
    %902 = vmatpush2.bf16.msra.mxu0 0
    %903 = vmatprep.subr.bf16.mxu0 0
    %904 = vmatpush2.bf16.msra.mxu0 0
    %905 = vmatprep.mubr.bf16.mxu0 0
    %906 = vmatmul.mubr.bf16.gmra.mxu0 %v678
    %v907 = vpop.f32.mrf.mxu0
    %v908 = vadd.f32 %v859, %v907
    %v909 = vpop.f32.mrf.mxu0
    %v910 = vpop.f32.mrf.mxu0
    %v911 = vadd.f32 %v862, %v910
    %v912 = vpop.f32.mrf.mxu0
    %913 = vmatprep.mubr.bf16.mxu0 0
    %914 = vmatmul.mubr.bf16.gmra.mxu0 %v679
    %v915 = vpop.f32.mrf.mxu0
    %v916 = vadd.f32 %v867, %v915
    %v917 = vpop.f32.mrf.mxu0
    %v918 = vpop.f32.mrf.mxu0
    %v919 = vadd.f32 %v870, %v918
    %v920 = vpop.f32.mrf.mxu0
    %921 = vdwg.mxu0
    %v922 = vlaneseq
    %v923 = vshrl.u32 %v922, 7
    %v924 = vsub.s32 0, %v923
    %v925 = vrot.slane %v526, %v924
    %v926 = vmul.f32 %v908, %v925
    %v927 = vmul.f32 %v911, %v925
    %v928 = vmul.f32 %v916, %v925
    %v929 = vmul.f32 %v919, %v925
    %v930 = vlaneseq
    %v931 = vshrl.u32 %v930, 7
    %v932 = vsub.s32 0, %v931
    %v933 = vrot.slane %v527, %v932
    %v934 = vadd.f32 %v926, %v933
    %v935 = vadd.f32 %v927, %v933
    %v936 = vadd.f32 %v928, %v933
    %v937 = vadd.f32 %v929, %v933
    %v938 = vmax.f32 %v934, 0.0
    %v939 = vmax.f32 %v935, 0.0
    %v940 = vmax.f32 %v936, 0.0
    %v941 = vmax.f32 %v937, 0.0
    %v942 = vld [vmem:[%s2 + $0x6] sm:$0x1]
    %v943 = vld [vmem:[%s2 + $0x7] sm:$0x1]
    %v944 = vld [vmem:[#allocation2 + $0x180] sm:$0xf]
    %v945 = vld [vmem:[#allocation2 + $0x184] sm:$0xf]
    %v946 = vld [vmem:[#allocation2 + $0x188] sm:$0xf]
    %v947 = vld [vmem:[#allocation2 + $0x18c] sm:$0xf]
    %v948 = vld [vmem:[#allocation2 + $0x190] sm:$0xf]
    %v949 = vld [vmem:[#allocation2 + $0x194] sm:$0xf]
    %v950 = vld [vmem:[#allocation2 + $0x198] sm:$0xf]
    %v951 = vld [vmem:[#allocation2 + $0x19c] sm:$0xf]
    %v952 = vld [vmem:[#allocation2 + $0x1a0] sm:$0xf]
    %v953 = vld [vmem:[#allocation2 + $0x1a4] sm:$0xf]
    %v954 = vld [vmem:[#allocation2 + $0x1a8] sm:$0xf]
    %v955 = vld [vmem:[#allocation2 + $0x1ac] sm:$0xf]
    %v956 = vld [vmem:[#allocation2 + $0x1b0] sm:$0xf]
    %v957 = vld [vmem:[#allocation2 + $0x1b4] sm:$0xf]
    %v958 = vld [vmem:[#allocation2 + $0x1b8] sm:$0xf]
    %v959 = vld [vmem:[#allocation2 + $0x1bc] sm:$0xf]
    %v960 = vld [vmem:[#allocation2 + $0x1c0] sm:$0xf]
    %v961 = vld [vmem:[#allocation2 + $0x1c4] sm:$0xf]
    %v962 = vld [vmem:[#allocation2 + $0x1c8] sm:$0xf]
    %v963 = vld [vmem:[#allocation2 + $0x1cc] sm:$0xf]
    %v964 = vld [vmem:[#allocation2 + $0x1d0] sm:$0xf]
    %v965 = vld [vmem:[#allocation2 + $0x1d4] sm:$0xf]
    %v966 = vld [vmem:[#allocation2 + $0x1d8] sm:$0xf]
    %v967 = vld [vmem:[#allocation2 + $0x1dc] sm:$0xf]
    %v968 = vld [vmem:[#allocation2 + $0x1e0] sm:$0xf]
    %v969 = vld [vmem:[#allocation2 + $0x1e4] sm:$0xf]
    %v970 = vld [vmem:[#allocation2 + $0x1e8] sm:$0xf]
    %v971 = vld [vmem:[#allocation2 + $0x1ec] sm:$0xf]
    %v972 = vld [vmem:[#allocation2 + $0x1f0] sm:$0xf]
    %v973 = vld [vmem:[#allocation2 + $0x1f4] sm:$0xf]
    %v974 = vld [vmem:[#allocation2 + $0x1f8] sm:$0xf]
    %v975 = vld [vmem:[#allocation2 + $0x1fc] sm:$0xf]
    %v976 = vld [vmem:[#allocation2 + $0x200] sm:$0xf]
    %v977 = vld [vmem:[#allocation2 + $0x204] sm:$0xf]
    %v978 = vld [vmem:[#allocation2 + $0x208] sm:$0xf]
    %v979 = vld [vmem:[#allocation2 + $0x20c] sm:$0xf]
    %v980 = vld [vmem:[#allocation2 + $0x210] sm:$0xf]
    %v981 = vld [vmem:[#allocation2 + $0x214] sm:$0xf]
    %v982 = vld [vmem:[#allocation2 + $0x218] sm:$0xf]
    %v983 = vld [vmem:[#allocation2 + $0x21c] sm:$0xf]
    %v984 = vld [vmem:[#allocation2 + $0x220] sm:$0xf]
    %v985 = vld [vmem:[#allocation2 + $0x224] sm:$0xf]
    %v986 = vld [vmem:[#allocation2 + $0x228] sm:$0xf]
    %v987 = vld [vmem:[#allocation2 + $0x22c] sm:$0xf]
    %v988 = vld [vmem:[#allocation2 + $0x230] sm:$0xf]
    %v989 = vld [vmem:[#allocation2 + $0x234] sm:$0xf]
    %v990 = vld [vmem:[#allocation2 + $0x238] sm:$0xf]
    %v991 = vld [vmem:[#allocation2 + $0x23c] sm:$0xf]
    %v992 = vpack.c.bf16 %v939, %v938
    %v993 = vpack.c.bf16 %v941, %v940
    %994 = vmatprep.subr.bf16.mxu0 0
    %995 = vmatpush1.bf16.msra.mxu0 0
    %996 = vmatprep.subr.bf16.mxu0 0
    %997 = vmatpush1.bf16.msra.mxu0 0
    %998 = vmatprep.subr.bf16.mxu0 0
    %999 = vmatpush1.bf16.msra.mxu0 0
    %1000 = vmatprep.subr.bf16.mxu0 0
    %1001 = vmatpush1.bf16.msra.mxu0 0
    %1002 = vmatprep.subr.bf16.mxu0 0
    %1003 = vmatpush1.bf16.msra.mxu0 0
    %1004 = vmatprep.subr.bf16.mxu0 0
    %1005 = vmatpush1.bf16.msra.mxu0 0
    %1006 = vmatprep.subr.bf16.mxu0 0
    %1007 = vmatpush1.bf16.msra.mxu0 %v993
    %1008 = vmatprep.subr.bf16.mxu0 0
    %1009 = vmatpush1.bf16.msra.mxu0 %v992
    %1010 = vmatprep.subr.bf16.mxu0 0
    %1011 = vmatpush2.bf16.msra.mxu0 0
    %1012 = vmatprep.subr.bf16.mxu0 0
    %1013 = vmatpush2.bf16.msra.mxu0 0
    %1014 = vmatprep.subr.bf16.mxu0 0
    %1015 = vmatpush2.bf16.msra.mxu0 0
    %1016 = vmatprep.subr.bf16.mxu0 0
    %1017 = vmatpush2.bf16.msra.mxu0 0
    %1018 = vmatprep.subr.bf16.mxu0 0
    %1019 = vmatpush2.bf16.msra.mxu0 0
    %1020 = vmatprep.subr.bf16.mxu0 0
    %1021 = vmatpush2.bf16.msra.mxu0 0
    %1022 = vmatprep.subr.bf16.mxu0 0
    %1023 = vmatpush2.bf16.msra.mxu0 0
    %1024 = vmatprep.subr.bf16.mxu0 0
    %1025 = vmatpush2.bf16.msra.mxu0 0
    %1026 = vmatprep.mubr.bf16.mxu0 0
    %1027 = vmatmul.mubr.bf16.gmra.mxu0 %v141
    %v1028 = vpop.f32.mrf.mxu0
    %v1029 = vadd.f32 0.0, %v1028
    %v1030 = vpop.f32.mrf.mxu0
    %v1031 = vpop.f32.mrf.mxu0
    %v1032 = vadd.f32 0.0, %v1031
    %v1033 = vpop.f32.mrf.mxu0
    %1034 = vmatprep.mubr.bf16.mxu0 0
    %1035 = vmatmul.mubr.bf16.gmra.mxu0 %v144
    %v1036 = vpop.f32.mrf.mxu0
    %v1037 = vadd.f32 0.0, %v1036
    %v1038 = vpop.f32.mrf.mxu0
    %v1039 = vpop.f32.mrf.mxu0
    %v1040 = vadd.f32 0.0, %v1039
    %v1041 = vpop.f32.mrf.mxu0
    %1042 = vdwg.mxu0
    %v1043 = vpack.c.bf16 %v1032, %v1029
    %v1044 = vpack.c.bf16 %v1040, %v1037
    %1045 = vmatprep.subr.bf16.mxu0 0
    %1046 = vmatpush1.bf16.msra.mxu0 0
    %1047 = vmatprep.subr.bf16.mxu0 0
    %1048 = vmatpush1.bf16.msra.mxu0 0
    %1049 = vmatprep.subr.bf16.mxu0 0
    %1050 = vmatpush1.bf16.msra.mxu0 0
    %1051 = vmatprep.subr.bf16.mxu0 0
    %1052 = vmatpush1.bf16.msra.mxu0 0
    %1053 = vmatprep.subr.bf16.mxu0 0
    %1054 = vmatpush1.bf16.msra.mxu0 0
    %1055 = vmatprep.subr.bf16.mxu0 0
    %1056 = vmatpush1.bf16.msra.mxu0 0
    %1057 = vmatprep.subr.bf16.mxu0 0
    %1058 = vmatpush1.bf16.msra.mxu0 %v993
    %1059 = vmatprep.subr.bf16.mxu0 0
    %1060 = vmatpush1.bf16.msra.mxu0 %v992
    %1061 = vmatprep.subr.bf16.mxu0 0
    %1062 = vmatpush2.bf16.msra.mxu0 0
    %1063 = vmatprep.subr.bf16.mxu0 0
    %1064 = vmatpush2.bf16.msra.mxu0 0
    %1065 = vmatprep.subr.bf16.mxu0 0
    %1066 = vmatpush2.bf16.msra.mxu0 0
    %1067 = vmatprep.subr.bf16.mxu0 0
    %1068 = vmatpush2.bf16.msra.mxu0 0
    %1069 = vmatprep.subr.bf16.mxu0 0
    %1070 = vmatpush2.bf16.msra.mxu0 0
    %1071 = vmatprep.subr.bf16.mxu0 0
    %1072 = vmatpush2.bf16.msra.mxu0 0
    %1073 = vmatprep.subr.bf16.mxu0 0
    %1074 = vmatpush2.bf16.msra.mxu0 0
    %1075 = vmatprep.subr.bf16.mxu0 0
    %1076 = vmatpush2.bf16.msra.mxu0 0
    %1077 = vmatprep.mubr.bf16.mxu0 0
    %1078 = vmatmul.mubr.bf16.gmra.mxu0 %v208
    %v1079 = vpop.f32.mrf.mxu0
    %v1080 = vadd.f32 0.0, %v1079
    %v1081 = vpop.f32.mrf.mxu0
    %v1082 = vpop.f32.mrf.mxu0
    %v1083 = vadd.f32 0.0, %v1082
    %v1084 = vpop.f32.mrf.mxu0
    %1085 = vmatprep.mubr.bf16.mxu0 0
    %1086 = vmatmul.mubr.bf16.gmra.mxu0 %v211
    %v1087 = vpop.f32.mrf.mxu0
    %v1088 = vadd.f32 0.0, %v1087
    %v1089 = vpop.f32.mrf.mxu0
    %v1090 = vpop.f32.mrf.mxu0
    %v1091 = vadd.f32 0.0, %v1090
    %v1092 = vpop.f32.mrf.mxu0
    %1093 = vdwg.mxu0
    %v1094 = vpack.c.bf16 %v1083, %v1080
    %v1095 = vpack.c.bf16 %v1091, %v1088
    %v1144 = vunpack.c.l.b16 %v944
    %v1145 = vunpack.c.l.b16 %v945
    %v1146 = vunpack.c.l.b16 %v946
    %v1147 = vunpack.c.l.b16 %v947
    %v1148 = vunpack.c.l.b16 %v948
    %v1149 = vunpack.c.l.b16 %v949
    %v1150 = vunpack.c.l.b16 %v950
    %v1151 = vunpack.c.l.b16 %v951
    %v1152 = vunpack.c.l.b16 %v952
    %v1153 = vunpack.c.l.b16 %v953
    %v1154 = vunpack.c.l.b16 %v954
    %v1155 = vunpack.c.l.b16 %v955
    %v1156 = vunpack.c.l.b16 %v956
    %v1157 = vunpack.c.l.b16 %v957
    %v1158 = vunpack.c.l.b16 %v958
    %v1159 = vunpack.c.l.b16 %v959
    %v1160 = vunpack.c.l.b16 %v960
    %v1161 = vunpack.c.l.b16 %v961
    %v1162 = vunpack.c.l.b16 %v962
    %v1163 = vunpack.c.l.b16 %v963
    %v1164 = vunpack.c.l.b16 %v964
    %v1165 = vunpack.c.l.b16 %v965
    %v1166 = vunpack.c.l.b16 %v966
    %v1167 = vunpack.c.l.b16 %v967
    %v1168 = vunpack.c.l.b16 %v968
    %v1169 = vunpack.c.l.b16 %v969
    %v1170 = vunpack.c.l.b16 %v970
    %v1171 = vunpack.c.l.b16 %v971
    %v1172 = vunpack.c.l.b16 %v972
    %v1173 = vunpack.c.l.b16 %v973
    %v1174 = vunpack.c.l.b16 %v974
    %v1175 = vunpack.c.l.b16 %v975
    %v1176 = vunpack.c.l.b16 %v976
    %v1177 = vunpack.c.l.b16 %v977
    %v1178 = vunpack.c.l.b16 %v978
    %v1179 = vunpack.c.l.b16 %v979
    %v1180 = vunpack.c.l.b16 %v980
    %v1181 = vunpack.c.l.b16 %v981
    %v1182 = vunpack.c.l.b16 %v982
    %v1183 = vunpack.c.l.b16 %v983
    %v1184 = vunpack.c.l.b16 %v984
    %v1185 = vunpack.c.l.b16 %v985
    %v1186 = vunpack.c.l.b16 %v986
    %v1187 = vunpack.c.l.b16 %v987
    %v1188 = vunpack.c.l.b16 %v988
    %v1189 = vunpack.c.l.b16 %v989
    %v1190 = vunpack.c.l.b16 %v990
    %v1191 = vunpack.c.l.b16 %v991
    %v1192 = vpack.c.b16 %v1145, %v1144
    %v1193 = vpack.c.b16 %v1147, %v1146
    %v1194 = vpack.c.b16 %v1149, %v1148
    %v1195 = vpack.c.b16 %v1151, %v1150
    %v1196 = vpack.c.b16 %v1153, %v1152
    %v1197 = vpack.c.b16 %v1155, %v1154
    %v1198 = vpack.c.b16 %v1157, %v1156
    %v1199 = vpack.c.b16 %v1159, %v1158
    %v1200 = vpack.c.b16 %v1161, %v1160
    %v1201 = vpack.c.b16 %v1163, %v1162
    %v1202 = vpack.c.b16 %v1165, %v1164
    %v1203 = vpack.c.b16 %v1167, %v1166
    %v1204 = vpack.c.b16 %v1169, %v1168
    %v1205 = vpack.c.b16 %v1171, %v1170
    %v1206 = vpack.c.b16 %v1173, %v1172
    %v1207 = vpack.c.b16 %v1175, %v1174
    %v1208 = vpack.c.b16 %v1177, %v1176
    %v1209 = vpack.c.b16 %v1179, %v1178
    %v1210 = vpack.c.b16 %v1181, %v1180
    %v1211 = vpack.c.b16 %v1183, %v1182
    %v1212 = vpack.c.b16 %v1185, %v1184
    %v1213 = vpack.c.b16 %v1187, %v1186
    %v1214 = vpack.c.b16 %v1189, %v1188
    %v1215 = vpack.c.b16 %v1191, %v1190
    %1240 = vmatprep.subr.bf16.mxu0 0
    %1241 = vmatpush1.bf16.msra.mxu0 %v1199
    %1242 = vmatprep.subr.bf16.mxu0 0
    %1243 = vmatpush1.bf16.msra.mxu0 %v1198
    %1244 = vmatprep.subr.bf16.mxu0 0
    %1245 = vmatpush1.bf16.msra.mxu0 %v1197
    %1246 = vmatprep.subr.bf16.mxu0 0
    %1247 = vmatpush1.bf16.msra.mxu0 %v1196
    %1248 = vmatprep.subr.bf16.mxu0 0
    %1249 = vmatpush1.bf16.msra.mxu0 %v1195
    %1250 = vmatprep.subr.bf16.mxu0 0
    %1251 = vmatpush1.bf16.msra.mxu0 %v1194
    %1252 = vmatprep.subr.bf16.mxu0 0
    %1253 = vmatpush1.bf16.msra.mxu0 %v1193
    %1254 = vmatprep.subr.bf16.mxu0 0
    %1255 = vmatpush1.bf16.msra.mxu0 %v1192
    %1256 = vmatprep.subr.bf16.mxu0 0
    %1257 = vmatpush2.bf16.msra.mxu0 %v1207
    %1258 = vmatprep.subr.bf16.mxu0 0
    %1259 = vmatpush2.bf16.msra.mxu0 %v1206
    %1260 = vmatprep.subr.bf16.mxu0 0
    %1261 = vmatpush2.bf16.msra.mxu0 %v1205
    %1262 = vmatprep.subr.bf16.mxu0 0
    %1263 = vmatpush2.bf16.msra.mxu0 %v1204
    %1264 = vmatprep.subr.bf16.mxu0 0
    %1265 = vmatpush2.bf16.msra.mxu0 %v1203
    %1266 = vmatprep.subr.bf16.mxu0 0
    %1267 = vmatpush2.bf16.msra.mxu0 %v1202
    %1268 = vmatprep.subr.bf16.mxu0 0
    %1269 = vmatpush2.bf16.msra.mxu0 %v1201
    %1270 = vmatprep.subr.bf16.mxu0 0
    %1271 = vmatpush2.bf16.msra.mxu0 %v1200
    %1272 = vmatprep.mubr.bf16.mxu0 %v992
    %1273 = vmatmul.mubr.bf16.gmra.mxu0 %v1043
    %v1274 = vpop.f32.mrf.mxu0
    %v1275 = vadd.f32 0.0, %v1274
    %v1276 = vpop.f32.mrf.mxu0
    %v1277 = vpop.f32.mrf.mxu0
    %v1278 = vadd.f32 0.0, %v1277
    %v1279 = vpop.f32.mrf.mxu0
    %1280 = vmatprep.mubr.bf16.mxu0 %v993
    %1281 = vmatmul.mubr.bf16.gmra.mxu0 %v1044
    %v1282 = vpop.f32.mrf.mxu0
    %v1283 = vadd.f32 0.0, %v1282
    %v1284 = vpop.f32.mrf.mxu0
    %v1285 = vpop.f32.mrf.mxu0
    %v1286 = vadd.f32 0.0, %v1285
    %v1287 = vpop.f32.mrf.mxu0
    %1288 = vdwg.mxu0
    %1289 = vmatprep.subr.bf16.mxu0 0
    %1290 = vmatpush1.bf16.msra.mxu0 %v1215
    %1291 = vmatprep.subr.bf16.mxu0 0
    %1292 = vmatpush1.bf16.msra.mxu0 %v1214
    %1293 = vmatprep.subr.bf16.mxu0 0
    %1294 = vmatpush1.bf16.msra.mxu0 %v1213
    %1295 = vmatprep.subr.bf16.mxu0 0
    %1296 = vmatpush1.bf16.msra.mxu0 %v1212
    %1297 = vmatprep.subr.bf16.mxu0 0
    %1298 = vmatpush1.bf16.msra.mxu0 %v1211
    %1299 = vmatprep.subr.bf16.mxu0 0
    %1300 = vmatpush1.bf16.msra.mxu0 %v1210
    %1301 = vmatprep.subr.bf16.mxu0 0
    %1302 = vmatpush1.bf16.msra.mxu0 %v1209
    %1303 = vmatprep.subr.bf16.mxu0 0
    %1304 = vmatpush1.bf16.msra.mxu0 %v1208
    %1305 = vmatprep.subr.bf16.mxu0 0
    %1306 = vmatpush2.bf16.msra.mxu0 0
    %1307 = vmatprep.subr.bf16.mxu0 0
    %1308 = vmatpush2.bf16.msra.mxu0 0
    %1309 = vmatprep.subr.bf16.mxu0 0
    %1310 = vmatpush2.bf16.msra.mxu0 0
    %1311 = vmatprep.subr.bf16.mxu0 0
    %1312 = vmatpush2.bf16.msra.mxu0 0
    %1313 = vmatprep.subr.bf16.mxu0 0
    %1314 = vmatpush2.bf16.msra.mxu0 0
    %1315 = vmatprep.subr.bf16.mxu0 0
    %1316 = vmatpush2.bf16.msra.mxu0 0
    %1317 = vmatprep.subr.bf16.mxu0 0
    %1318 = vmatpush2.bf16.msra.mxu0 0
    %1319 = vmatprep.subr.bf16.mxu0 0
    %1320 = vmatpush2.bf16.msra.mxu0 0
    %1321 = vmatprep.mubr.bf16.mxu0 0
    %1322 = vmatmul.mubr.bf16.gmra.mxu0 %v1094
    %v1323 = vpop.f32.mrf.mxu0
    %v1324 = vadd.f32 %v1275, %v1323
    %v1325 = vpop.f32.mrf.mxu0
    %v1326 = vpop.f32.mrf.mxu0
    %v1327 = vadd.f32 %v1278, %v1326
    %v1328 = vpop.f32.mrf.mxu0
    %1329 = vmatprep.mubr.bf16.mxu0 0
    %1330 = vmatmul.mubr.bf16.gmra.mxu0 %v1095
    %v1331 = vpop.f32.mrf.mxu0
    %v1332 = vadd.f32 %v1283, %v1331
    %v1333 = vpop.f32.mrf.mxu0
    %v1334 = vpop.f32.mrf.mxu0
    %v1335 = vadd.f32 %v1286, %v1334
    %v1336 = vpop.f32.mrf.mxu0
    %1337 = vdwg.mxu0
    %v1338 = vlaneseq
    %v1339 = vshrl.u32 %v1338, 7
    %v1340 = vsub.s32 0, %v1339
    %v1341 = vrot.slane %v942, %v1340
    %v1342 = vmul.f32 %v1324, %v1341
    %v1343 = vmul.f32 %v1327, %v1341
    %v1344 = vmul.f32 %v1332, %v1341
    %v1345 = vmul.f32 %v1335, %v1341
    %v1346 = vlaneseq
    %v1347 = vshrl.u32 %v1346, 7
    %v1348 = vsub.s32 0, %v1347
    %v1349 = vrot.slane %v943, %v1348
    %v1350 = vadd.f32 %v1342, %v1349
    %v1351 = vadd.f32 %v1343, %v1349
    %v1352 = vadd.f32 %v1344, %v1349
    %v1353 = vadd.f32 %v1345, %v1349
    %v1354 = vadd.f32 %v1350, %v522
    %v1355 = vadd.f32 %v1351, %v523
    %v1356 = vadd.f32 %v1352, %v524
    %v1357 = vadd.f32 %v1353, %v525
    %v1358 = vmax.f32 %v1354, 0.0
    %v1359 = vmax.f32 %v1355, 0.0
    %v1360 = vmax.f32 %v1356, 0.0
    %v1361 = vmax.f32 %v1357, 0.0
    %v1362 = vpack.c.bf16 %v1359, %v1358
    %v1363 = vpack.c.bf16 %v1361, %v1360
    %v1365 = vsel %vm139, %v38, 0
    %1367 = vmatprep.subr.bf16.mxu0 0
    %1368 = vmatpush1.bf16.msra.mxu0 0
    %1369 = vmatprep.subr.bf16.mxu0 0
    %1370 = vmatpush1.bf16.msra.mxu0 0
    %1371 = vmatprep.subr.bf16.mxu0 0
    %1372 = vmatpush1.bf16.msra.mxu0 0
    %1373 = vmatprep.subr.bf16.mxu0 0
    %1374 = vmatpush1.bf16.msra.mxu0 0
    %1375 = vmatprep.subr.bf16.mxu0 0
    %1376 = vmatpush1.bf16.msra.mxu0 0
    %1377 = vmatprep.subr.bf16.mxu0 0
    %1378 = vmatpush1.bf16.msra.mxu0 0
    %1379 = vmatprep.subr.bf16.mxu0 0
    %1380 = vmatpush1.bf16.msra.mxu0 %v1363
    %1381 = vmatprep.subr.bf16.mxu0 0
    %1382 = vmatpush1.bf16.msra.mxu0 %v1362
    %1383 = vmatprep.subr.bf16.mxu0 0
    %1384 = vmatpush2.bf16.msra.mxu0 0
    %1385 = vmatprep.subr.bf16.mxu0 0
    %1386 = vmatpush2.bf16.msra.mxu0 0
    %1387 = vmatprep.subr.bf16.mxu0 0
    %1388 = vmatpush2.bf16.msra.mxu0 0
    %1389 = vmatprep.subr.bf16.mxu0 0
    %1390 = vmatpush2.bf16.msra.mxu0 0
    %1391 = vmatprep.subr.bf16.mxu0 0
    %1392 = vmatpush2.bf16.msra.mxu0 0
    %1393 = vmatprep.subr.bf16.mxu0 0
    %1394 = vmatpush2.bf16.msra.mxu0 0
    %1395 = vmatprep.subr.bf16.mxu0 0
    %1396 = vmatpush2.bf16.msra.mxu0 0
    %1397 = vmatprep.subr.bf16.mxu0 0
    %1398 = vmatpush2.bf16.msra.mxu0 0
    %1399 = vmatprep.mubr.bf16.mxu0 0
    %1400 = vmatmul.mubr.bf16.gmra.mxu0 %v1365
    %v1401 = vpop.f32.mrf.mxu0
    %v1402 = vadd.f32 0.0, %v1401
    %v1403 = vpop.f32.mrf.mxu0
    %v1404 = vpop.f32.mrf.mxu0
    %v1405 = vpop.f32.mrf.mxu0
    %1406 = vdwg.mxu0
    %v1407 = vpack.c.bf16 %v1402, %v1402
    %v1408 = vld [vmem:[%s2 + $0x8] sm:$0x1]
    %v1409 = vlaneseq
    %v1410 = vshrl.u32 %v1409, 7
    %v1411 = vsub.s32 0, %v1410
    %v1412 = vrot.slane %v1408, %v1411
    %v1429 = vunpack.c.l.b16 %v39
    %v1430 = vunpack.c.l.b16 %v40
    %v1431 = vunpack.c.l.b16 %v41
    %v1432 = vunpack.c.l.b16 %v42
    %v1433 = vunpack.c.l.b16 %v43
    %v1434 = vunpack.c.l.b16 %v44
    %v1435 = vunpack.c.l.b16 %v45
    %v1436 = vunpack.c.l.b16 %v46
    %v1437 = vunpack.c.l.b16 %v47
    %v1438 = vunpack.c.l.b16 %v48
    %v1439 = vunpack.c.l.b16 %v49
    %v1440 = vunpack.c.l.b16 %v50
    %v1441 = vunpack.c.l.b16 %v51
    %v1442 = vunpack.c.l.b16 %v52
    %v1443 = vunpack.c.l.b16 %v53
    %v1444 = vunpack.c.l.b16 %v54
    %v1445 = vpack.c.b16 %v1430, %v1429
    %v1446 = vpack.c.b16 %v1432, %v1431
    %v1447 = vpack.c.b16 %v1434, %v1433
    %v1448 = vpack.c.b16 %v1436, %v1435
    %v1449 = vpack.c.b16 %v1438, %v1437
    %v1450 = vpack.c.b16 %v1440, %v1439
    %v1451 = vpack.c.b16 %v1442, %v1441
    %v1452 = vpack.c.b16 %v1444, %v1443
    %1461 = vmatprep.subr.bf16.mxu0 0
    %1462 = vmatpush1.bf16.msra.mxu0 %v1452
    %1463 = vmatprep.subr.bf16.mxu0 0
    %1464 = vmatpush1.bf16.msra.mxu0 %v1451
    %1465 = vmatprep.subr.bf16.mxu0 0
    %1466 = vmatpush1.bf16.msra.mxu0 %v1450
    %1467 = vmatprep.subr.bf16.mxu0 0
    %1468 = vmatpush1.bf16.msra.mxu0 %v1449
    %1469 = vmatprep.subr.bf16.mxu0 0
    %1470 = vmatpush1.bf16.msra.mxu0 %v1448
    %1471 = vmatprep.subr.bf16.mxu0 0
    %1472 = vmatpush1.bf16.msra.mxu0 %v1447
    %1473 = vmatprep.subr.bf16.mxu0 0
    %1474 = vmatpush1.bf16.msra.mxu0 %v1446
    %1475 = vmatprep.subr.bf16.mxu0 0
    %1476 = vmatpush1.bf16.msra.mxu0 %v1445
    %1477 = vmatprep.subr.bf16.mxu0 0
    %1478 = vmatpush2.bf16.msra.mxu0 0
    %1479 = vmatprep.subr.bf16.mxu0 0
    %1480 = vmatpush2.bf16.msra.mxu0 0
    %1481 = vmatprep.subr.bf16.mxu0 0
    %1482 = vmatpush2.bf16.msra.mxu0 0
    %1483 = vmatprep.subr.bf16.mxu0 0
    %1484 = vmatpush2.bf16.msra.mxu0 0
    %1485 = vmatprep.subr.bf16.mxu0 0
    %1486 = vmatpush2.bf16.msra.mxu0 0
    %1487 = vmatprep.subr.bf16.mxu0 0
    %1488 = vmatpush2.bf16.msra.mxu0 0
    %1489 = vmatprep.subr.bf16.mxu0 0
    %1490 = vmatpush2.bf16.msra.mxu0 0
    %1491 = vmatprep.subr.bf16.mxu0 0
    %1492 = vmatpush2.bf16.msra.mxu0 0
    %1493 = vmatprep.mubr.bf16.mxu0 0
    %1494 = vmatmul.mubr.bf16.gmra.mxu0 %v1407
    %v1495 = vpop.f32.mrf.mxu0
    %v1496 = vadd.f32 %v1412, %v1495
    %v1497 = vpop.f32.mrf.mxu0
    %v1498 = vpop.f32.mrf.mxu0
    %v1499 = vpop.f32.mrf.mxu0
    %1500 = vdwg.mxu0
    %1501 = vst [vmem:[#allocation5] sm:$0x3] %v1496
    // Predicated region
    $region18: #{normalized_resnet_forward.1} parent=1 // pred_check
      _
    $region19: #{normalized_resnet_forward.1} parent=1 // pred_check_branch
      %1503 = sbr.rel (0) target = $region21
    $region20: #{normalized_resnet_forward.1} parent=1 // pred_region
      %s1505 = ssub.s32 32, 32
      %1506 = vsyncadd [#allocation4], %s1505
      %s1508 = sshll.u32 [#allocation5], 4
      %s1509 = int_to_ptr.vmem [resolvable:$true] %s1508
      %1511 = dma.vmem_to_hbm [thread:$0]  %s1509, 32, %s3, [#allocation4]
    $region21: #{normalized_resnet_forward.1} parent=1 // pred_fallthru
      _
    // Predicated region
    $region22: #{normalized_resnet_forward.1} parent=1 // pred_check
      _
    $region23: #{normalized_resnet_forward.1} parent=1 // pred_check_branch
      %1513 = sbr.rel (0) target = $region25
    $region24: #{normalized_resnet_forward.1} parent=1 // pred_region
      %1514 = dma.done [#allocation4], 32
    $region25: #{normalized_resnet_forward.1} parent=1 // pred_fallthru
      _
    %1515 = vsyncpa [#allocation3], 1
    %1516 = vsyncpa [#allocation4], 1

</llo_original>
